<compile_context>
chip_gen: v7x
topology: tpu7x:2x2x1
jax: 0.10.0
libtpu: 0.0.40
codegen_flags: <defaults>
</compile_context>

<pallas_src>
from collections import namedtuple

import jax
import jax.numpy as jnp
from jax.experimental import pallas as pl
from jax.experimental.pallas import tpu as pltpu


# ----------------------------- mode -> pieces ---------------------------------
# Every aggregate is a concatenation of D-wide "pieces"; the first Linear's
# weight is row-split per piece so no in-kernel concat is needed.
_MODE_PIECES = {
    "mean": ("mean",),
    "max": ("max",),
    "min": ("min",),
    "maxmin": ("maxmin",),
    "std": ("std",),
    "norm2": ("norm2",),
    "mean_std": ("mean", "std"),
    "norm_maxmin": ("norm2", "maxmin"),
}

_HeadPlan = namedtuple(
    "_HeadPlan",
    ["pieces",    # tuple of piece names (each D wide)
     "first_w",   # per-piece weight index for layer 0 (column-embedded if final_w is None)
     "first_b",   # layer-0 bias index, or None when the head is a single Linear
     "mid",       # tuple of (w_idx, b_idx) for layers 1..nl-2
     "final_w"],  # column-embedded last-layer weight index, or None when nl == 1
)


def _round_up(x, m):
    return ((x + m - 1) // m) * m


# ----------------------------- kernel ------------------------------------------


def _make_kernel(head_plans, b_all_idx, need_max, need_min, need_sum,
                 need_sumsq, need_var, used_pieces):
    """Fused kernel: shared node-axis stats -> abs -> per-head MLP -> one slab."""

    def kernel(x_ref, *refs):
        out_ref = refs[-1]
        w = refs[:-1]

        n = x_ref.shape[1]
        inv_n = 1.0 / n
        x = x_ref[...]                       # native dtype (TE, N, D): no full f32 upcast

        # ---- shared one-pass statistics over the node axis -------------------
        mx = jnp.max(x, axis=1) if need_max else None
        mn = jnp.min(x, axis=1) if need_min else None

        s = ss = None
        if need_sum or need_sumsq:
            for i in range(n):               # f32 accumulation from per-node slices
                xi = x[:, i, :].astype(jnp.float32)
                if need_sum:
                    s = xi if s is None else s + xi
                if need_sumsq:
                    sq = xi * xi
                    ss = sq if ss is None else ss + sq
        mean = s * inv_n if need_sum else None
        meansq = ss * inv_n if need_sumsq else None

        var = None
        if need_var:                         # centered pass == torch.std(unbiased=False)
            v = None
            for i in range(n):
                d = x[:, i, :].astype(jnp.float32) - mean
                dd = d * d
                v = dd if v is None else v + dd
            var = v * inv_n

        pieces = {}
        if "mean" in used_pieces:
            pieces["mean"] = mean
        if "max" in used_pieces:
            pieces["max"] = mx.astype(jnp.float32)
        if "min" in used_pieces:
            pieces["min"] = mn.astype(jnp.float32)
        if "maxmin" in used_pieces:
            pieces["maxmin"] = mx.astype(jnp.float32) - mn.astype(jnp.float32)
        if "std" in used_pieces:
            pieces["std"] = jnp.sqrt(var)
        if "norm2" in used_pieces:
            pieces["norm2"] = jnp.sqrt(meansq)

        # classify(): torch.linalg.norm over a size-1 leading axis == abs.
        apieces = {k: jnp.abs(v) for k, v in pieces.items()}

        # ---- per-head MLPs, all accumulated into one lane-dense slab ---------
        acc = None
        for plan in head_plans:
            if plan.final_w is None:
                # single-Linear head: layer 0 is already column-embedded
                for pc, widx in zip(plan.pieces, plan.first_w):
                    t = jnp.dot(apieces[pc], w[widx][...],
                                preferred_element_type=jnp.float32)
                    acc = t if acc is None else acc + t
            else:
                h = None
                for pc, widx in zip(plan.pieces, plan.first_w):
                    t = jnp.dot(apieces[pc], w[widx][...],
                                preferred_element_type=jnp.float32)
                    h = t if h is None else h + t
                h = jnp.maximum(h + w[plan.first_b][...], 0.0)      # nn.ReLU(True)
                for widx, bidx in plan.mid:
                    h = jnp.maximum(
                        jnp.dot(h, w[widx][...], preferred_element_type=jnp.float32)
                        + w[bidx][...], 0.0)
                t = jnp.dot(h, w[plan.final_w][...],
                            preferred_element_type=jnp.float32)
                acc = t if acc is None else acc + t

        out_ref[...] = (acc + w[b_all_idx][...]).astype(out_ref.dtype)

    return kernel


# ----------------------------- wrapper ------------------------------------------


def _vmem_budget_bytes():
    """Scoped-VMEM budget: ~3/4 of per-core VMEM, capped at 96 MiB (v7x = 64 MiB/TC)."""
    try:
        phys = int(pltpu.get_tpu_info().vmem_capacity_bytes)
    except Exception:
        phys = 64 * 1024 * 1024          # smallest per-TensorCore VMEM (v7x)
    return min(phys * 3 // 4, 96 * 1024 * 1024)


def _build_plan(mode_params, D):
    """Flatten / dedupe / transform the head weights and build static head plans."""
    out_dims, offs = [], []
    off = 0
    for _, params in mode_params:
        od = int(params[-1][0].shape[1])
        out_dims.append(od)
        offs.append(off)
        off += od
    total_pad = _round_up(off, 128)      # single lane-dense output slab

    arrays, key2idx = [], {}

    def add(key, build):
        if key in key2idx:
            return key2idx[key]
        idx = len(arrays)
        arrays.append(build())
        key2idx[key] = idx
        return idx

    b_all = jnp.zeros((1, total_pad), jnp.float32)
    plans = []
    for hm, (mode, params) in enumerate(mode_params):
        pieces = _MODE_PIECES[mode]
        k = len(pieces)
        nl = len(params)
        w0, b0 = params[0]
        w_last, b_last = params[-1]
        od, offm = out_dims[hm], offs[hm]

        if nl == 1:
            # single Linear: layer 0 IS the last layer -> embed row blocks by column
            first_w = []
            for j in range(k):
                key = ("wrowemb", id(w0), j, k, offm, total_pad)

                def build(w0=w0, j=j, offm=offm, od=od):
                    blk = jnp.asarray(w0, jnp.float32)[j * D:(j + 1) * D, :]
                    z = jnp.zeros((D, total_pad), jnp.float32)
                    return z.at[:, offm:offm + od].set(blk)

                first_w.append(add(key, build))
            plans.append(_HeadPlan(pieces, tuple(first_w), None, (), None))
        else:
            first_w = []
            for j in range(k):
                if k == 1:
                    key = ("w", id(w0))

                    def build(w0=w0):
                        return jnp.asarray(w0, jnp.float32)
                else:
                    key = ("wrow", id(w0), j, k)

                    def build(w0=w0, j=j):
                        return jnp.asarray(w0, jnp.float32)[j * D:(j + 1) * D, :]

                first_w.append(add(key, build))
            first_b = add(("b", id(b0)),
                          lambda b0=b0: jnp.asarray(b0, jnp.float32).reshape(1, -1))
            mid = []
            for wi, bi in params[1:-1]:
                wmid = add(("w", id(wi)), lambda wi=wi: jnp.asarray(wi, jnp.float32))
                bmid = add(("b", id(bi)),
                           lambda bi=bi: jnp.asarray(bi, jnp.float32).reshape(1, -1))
                mid.append((wmid, bmid))

            def build_emb(w_last=w_last, offm=offm, od=od):
                z = jnp.zeros((int(w_last.shape[0]), total_pad), jnp.float32)
                return z.at[:, offm:offm + od].set(jnp.asarray(w_last, jnp.float32))

            fin = add(("wemb", id(w_last), offm, total_pad), build_emb)
            plans.append(_HeadPlan(pieces, tuple(first_w), first_b, tuple(mid), fin))

        b_all = b_all.at[0, offm:offm + od].set(
            jnp.asarray(b_last, jnp.float32).reshape(-1))

    b_all_idx = len(arrays)
    arrays.append(b_all)
    return plans, arrays, b_all_idx, out_dims, offs, total_pad


def aggregator_forward_fused(embeddings, mode_params):
    """Run several (agg_mode, params) heads on the same embeddings in ONE
    pallas_call, streaming (E, N, D) from HBM exactly once.

    embeddings: (E, N, D) array (any float dtype; streamed in its native dtype).
    mode_params: sequence of (agg_mode, params), params = tuple of (W[in,out], b[out]).
    Returns: list of (E, out_dim) float32 predictions, one per head.
    """
    E, N, D = embeddings.shape
    modes = [m for m, _ in mode_params]
    for m in modes:
        if m not in _MODE_PIECES:
            raise ValueError(f"unsupported agg_mode: {m}")

    plans, arrays, b_all_idx, out_dims, offs, total_pad = _build_plan(mode_params, D)

    used = set()
    for m in modes:
        used.update(_MODE_PIECES[m])
    need_max = bool(used & {"max", "maxmin"})
    need_min = bool(used & {"min", "maxmin"})
    need_var = "std" in used
    need_sum = ("mean" in used) or need_var
    need_sumsq = "norm2" in used

    # ---- tile size from the VMEM budget (accounting for layout padding) ------
    itemsize = jnp.dtype(embeddings.dtype).itemsize
    d_lane = _round_up(D, 128)
    sub = 8 * max(1, 4 // itemsize)                       # sublane packing of native dtype
    in_row = _round_up(N, sub) * d_lane * itemsize        # VMEM bytes per edge row (input)
    max_hidden = 1
    for _, params in mode_params:
        for wi, _ in params[:-1]:
            max_hidden = max(max_hidden, int(wi.shape[1]))
    work_row = (10 * d_lane + 2 * _round_up(max_hidden, 128) + 2 * total_pad) * 4
    per_row = 2 * in_row + 2 * total_pad * 4 + work_row   # 2x = double buffering
    fixed = 2 * sum(int(a.size) * 4 for a in arrays) + (2 << 20)

    budget = _vmem_budget_bytes()
    TE = max(8, (budget - fixed) // per_row)
    TE = min(int(TE), 2048)
    if E >= 16:
        # keep >= 2 grid steps so the "parallel" axis feeds both v7x TensorCores
        TE = min(TE, _round_up((E + 1) // 2, 8))
    else:
        TE = min(TE, _round_up(max(E, 1), 8))
    TE = max(8, (TE // 8) * 8)
    E_pad = _round_up(E, TE)

    x = embeddings
    if E_pad != E:
        # zero-pad the edge axis so the last tile holds no garbage rows
        x = jnp.pad(x, ((0, E_pad - E), (0, 0), (0, 0)))

    grid = (E_pad // TE,)
    in_specs = [pl.BlockSpec((TE, N, D), lambda i: (i, 0, 0))]
    for a in arrays:
        # full block, same index every step -> weights stay resident in VMEM
        in_specs.append(pl.BlockSpec(a.shape, lambda i: (0, 0)))
    out_specs = pl.BlockSpec((TE, total_pad), lambda i: (i, 0))
    out_shape = jax.ShapeDtypeStruct((E_pad, total_pad), jnp.float32)

    # advisory cost estimate (HBM stream + MLP flops)
    mlp_flops = 0
    for _, params in mode_params:
        mlp_flops += sum(2 * int(wi.shape[0]) * int(wi.shape[1]) for wi, _ in params)
    flops = E_pad * (mlp_flops + 6 * N * D)
    transcendentals = E_pad * D * sum(1 for p in ("std", "norm2") if p in used)
    bytes_accessed = (E_pad * N * D * itemsize + E_pad * total_pad * 4
                      + sum(int(a.size) * 4 for a in arrays))

    kernel = _make_kernel(tuple(plans), b_all_idx, need_max, need_min,
                          need_sum, need_sumsq, need_var, frozenset(used))

    out = pl.pallas_call(
        kernel,
        grid=grid,
        in_specs=in_specs,
        out_specs=out_specs,
        out_shape=out_shape,
        compiler_params=pltpu.CompilerParams(
            dimension_semantics=("parallel",),
            vmem_limit_bytes=int(budget)),
        cost_estimate=pl.CostEstimate(
            flops=int(flops),
            transcendentals=int(transcendentals),
            bytes_accessed=int(bytes_accessed)),
    )(x, *arrays)

    return [out[:E, o:o + od] for o, od in zip(offs, out_dims)]


def aggregator_forward(embeddings, params, agg_mode):
    """Single-mode forward: (E, N, D) -> (E, out_dim)."""
    return aggregator_forward_fused(embeddings, [(agg_mode, params)])[0]


def _init_cls_params(key, layers):
    """Deterministic init for nn.Sequential(Linear, ReLU, ..., Linear)."""
    params = []
    keys = jax.random.split(key, 2 * (len(layers) - 1))
    for i in range(len(layers) - 1):
        fan_in = layers[i]
        w = jax.random.normal(
            keys[2 * i], (layers[i], layers[i + 1]), jnp.float32) / jnp.sqrt(fan_in)
        b = jax.random.normal(
            keys[2 * i + 1], (layers[i + 1],), jnp.float32) * 0.01
        params.append((w, b))
    return tuple(params)


# ----------------------------- reference (pure JAX) ----------------------------


def _ref_forward(embeddings, params, agg_mode):
    x = jnp.asarray(embeddings, jnp.float32)
    mean = jnp.mean(x, axis=1)
    std = jnp.sqrt(jnp.mean((x - mean[:, None, :]) ** 2, axis=1))
    mx = jnp.max(x, axis=1)
    mn = jnp.min(x, axis=1)
    norm2 = jnp.sqrt(jnp.mean(x * x, axis=1))
    if agg_mode == "mean":
        h = mean
    elif agg_mode == "max":
        h = mx
    elif agg_mode == "min":
        h = mn
    elif agg_mode == "maxmin":
        h = mx - mn
    elif agg_mode == "std":
        h = std
    elif agg_mode == "norm2":
        h = norm2
    elif agg_mode == "mean_std":
        h = jnp.concatenate([mean, std], axis=1)
    elif agg_mode == "norm_maxmin":
        h = jnp.concatenate([norm2, mx - mn], axis=1)
    else:
        raise ValueError(agg_mode)
    h = jnp.abs(h)
    for i, (w, b) in enumerate(params):
        h = h @ jnp.asarray(w, jnp.float32) + jnp.asarray(b, jnp.float32)
        if i != len(params) - 1:
            h = jnp.maximum(h, 0.0)
    return h


# ----------------------------- demo --------------------------------------------


if __name__ == "__main__":
    key = jax.random.PRNGKey(0)
    k_x, k_p1, k_p2, k_p3 = jax.random.split(key, 4)

    E, N, D = 6, 8, 32                 # 6 edges, 8 nodes each, output_dim=32
    layers = [D, 64, 8]                # cls: Linear(32,64) -> ReLU -> Linear(64,8)
    layers_cat = [2 * D, 64, 8]        # cls for concatenating agg modes
    layers_single = [D, 8]             # one-Linear head

    embeddings = jax.random.normal(k_x, (E, N, D), dtype=jnp.float32)
    params = _init_cls_params(k_p1, layers)
    params_cat = _init_cls_params(k_p2, layers_cat)
    params_single = _init_cls_params(k_p3, layers_single)

    heads = [
        ("mean", params),
        ("maxmin", params),            # shares its MLP with "mean" -> weights deduped
        ("mean_std", params_cat),
        ("norm_maxmin", params_cat),
        ("std", params_single),
    ]

    # Fused: all heads share one HBM read of the embeddings and one output slab.
    outs = aggregator_forward_fused(embeddings, heads)
    # Single-mode path (one head) still works.
    p_mean_single = aggregator_forward(embeddings, params, "mean")
    jax.block_until_ready((outs, p_mean_single))

    for (mode, prm), o in zip(heads, outs):
        ref = _ref_forward(embeddings, prm, mode)
        assert o.shape == ref.shape, (mode, o.shape, ref.shape)
        assert bool(jnp.all(jnp.isfinite(o))), mode
        assert bool(jnp.allclose(o, ref, atol=5e-4, rtol=5e-4)), mode
    assert bool(jnp.allclose(p_mean_single, outs[0], atol=1e-5, rtol=1e-5))

    print("KERNEL_OK")
</pallas_src>

<mosaic_0001>
module attributes {stable_mosaic.version = 11 : i64} {
  func.func @kernel(%arg0: i32, %arg1: memref<8x8x32xf32, #tpu.memory_space<vmem>>, %arg2: memref<32x64xf32, #tpu.memory_space<vmem>>, %arg3: memref<1x64xf32, #tpu.memory_space<vmem>>, %arg4: memref<64x128xf32, #tpu.memory_space<vmem>>, %arg5: memref<64x128xf32, #tpu.memory_space<vmem>>, %arg6: memref<32x64xf32, #tpu.memory_space<vmem>>, %arg7: memref<32x64xf32, #tpu.memory_space<vmem>>, %arg8: memref<1x64xf32, #tpu.memory_space<vmem>>, %arg9: memref<64x128xf32, #tpu.memory_space<vmem>>, %arg10: memref<64x128xf32, #tpu.memory_space<vmem>>, %arg11: memref<32x128xf32, #tpu.memory_space<vmem>>, %arg12: memref<1x128xf32, #tpu.memory_space<vmem>>, %arg13: memref<8x128xf32, #tpu.memory_space<vmem>>) attributes {dimension_semantics = [#tpu.dimension_semantics<parallel>], iteration_bounds = array<i64: 1>, scalar_prefetch = 0 : i64, scratch_operands = 0 : i64, tpu.core_type = #tpu.core_type<tc>, window_params = [{transform_indices = @transform_0, window_bounds = array<i64: 8, 8, 32>}, {pipeline_mode = #tpu.pipeline_mode<synchronous>, transform_indices = @transform_1, window_bounds = array<i64: 32, 64>}, {pipeline_mode = #tpu.pipeline_mode<synchronous>, transform_indices = @transform_2, window_bounds = array<i64: 1, 64>}, {pipeline_mode = #tpu.pipeline_mode<synchronous>, transform_indices = @transform_3, window_bounds = array<i64: 64, 128>}, {pipeline_mode = #tpu.pipeline_mode<synchronous>, transform_indices = @transform_4, window_bounds = array<i64: 64, 128>}, {pipeline_mode = #tpu.pipeline_mode<synchronous>, transform_indices = @transform_5, window_bounds = array<i64: 32, 64>}, {pipeline_mode = #tpu.pipeline_mode<synchronous>, transform_indices = @transform_6, window_bounds = array<i64: 32, 64>}, {pipeline_mode = #tpu.pipeline_mode<synchronous>, transform_indices = @transform_7, window_bounds = array<i64: 1, 64>}, {pipeline_mode = #tpu.pipeline_mode<synchronous>, transform_indices = @transform_8, window_bounds = array<i64: 64, 128>}, {pipeline_mode = #tpu.pipeline_mode<synchronous>, transform_indices = @transform_9, window_bounds = array<i64: 64, 128>}, {pipeline_mode = #tpu.pipeline_mode<synchronous>, transform_indices = @transform_10, window_bounds = array<i64: 32, 128>}, {pipeline_mode = #tpu.pipeline_mode<synchronous>, transform_indices = @transform_11, window_bounds = array<i64: 1, 128>}, {transform_indices = @transform_12, window_bounds = array<i64: 8, 128>}]} {
    %c0 = arith.constant 0 : index
    %c0_0 = arith.constant 0 : index
    %c0_1 = arith.constant 0 : index
    %0 = vector.load %arg1[%c0, %c0_0, %c0_1] : memref<8x8x32xf32, #tpu.memory_space<vmem>>, vector<8x8x32xf32>
    %cst = arith.constant dense<0xFF800000> : vector<8x32xf32>
    %1 = vector.multi_reduction <maximumf>, %0, %cst [1] : vector<8x8x32xf32> to vector<8x32xf32>
    %cst_2 = arith.constant dense<0x7F800000> : vector<8x32xf32>
    %2 = vector.multi_reduction <minimumf>, %0, %cst_2 [1] : vector<8x8x32xf32> to vector<8x32xf32>
    %3 = vector.extract_strided_slice %0 {offsets = [0, 0, 0], sizes = [8, 1, 32], strides = [1, 1, 1]} : vector<8x8x32xf32> to vector<8x1x32xf32>
    %4 = vector.shape_cast %3 : vector<8x1x32xf32> to vector<8x32xf32>
    %5 = arith.mulf %4, %4 : vector<8x32xf32>
    %6 = vector.extract_strided_slice %0 {offsets = [0, 1, 0], sizes = [8, 1, 32], strides = [1, 1, 1]} : vector<8x8x32xf32> to vector<8x1x32xf32>
    %7 = vector.shape_cast %6 : vector<8x1x32xf32> to vector<8x32xf32>
    %8 = arith.addf %4, %7 : vector<8x32xf32>
    %9 = arith.mulf %7, %7 : vector<8x32xf32>
    %10 = arith.addf %5, %9 : vector<8x32xf32>
    %11 = vector.extract_strided_slice %0 {offsets = [0, 2, 0], sizes = [8, 1, 32], strides = [1, 1, 1]} : vector<8x8x32xf32> to vector<8x1x32xf32>
    %12 = vector.shape_cast %11 : vector<8x1x32xf32> to vector<8x32xf32>
    %13 = arith.addf %8, %12 : vector<8x32xf32>
    %14 = arith.mulf %12, %12 : vector<8x32xf32>
    %15 = arith.addf %10, %14 : vector<8x32xf32>
    %16 = vector.extract_strided_slice %0 {offsets = [0, 3, 0], sizes = [8, 1, 32], strides = [1, 1, 1]} : vector<8x8x32xf32> to vector<8x1x32xf32>
    %17 = vector.shape_cast %16 : vector<8x1x32xf32> to vector<8x32xf32>
    %18 = arith.addf %13, %17 : vector<8x32xf32>
    %19 = arith.mulf %17, %17 : vector<8x32xf32>
    %20 = arith.addf %15, %19 : vector<8x32xf32>
    %21 = vector.extract_strided_slice %0 {offsets = [0, 4, 0], sizes = [8, 1, 32], strides = [1, 1, 1]} : vector<8x8x32xf32> to vector<8x1x32xf32>
    %22 = vector.shape_cast %21 : vector<8x1x32xf32> to vector<8x32xf32>
    %23 = arith.addf %18, %22 : vector<8x32xf32>
    %24 = arith.mulf %22, %22 : vector<8x32xf32>
    %25 = arith.addf %20, %24 : vector<8x32xf32>
    %26 = vector.extract_strided_slice %0 {offsets = [0, 5, 0], sizes = [8, 1, 32], strides = [1, 1, 1]} : vector<8x8x32xf32> to vector<8x1x32xf32>
    %27 = vector.shape_cast %26 : vector<8x1x32xf32> to vector<8x32xf32>
    %28 = arith.addf %23, %27 : vector<8x32xf32>
    %29 = arith.mulf %27, %27 : vector<8x32xf32>
    %30 = arith.addf %25, %29 : vector<8x32xf32>
    %31 = vector.extract_strided_slice %0 {offsets = [0, 6, 0], sizes = [8, 1, 32], strides = [1, 1, 1]} : vector<8x8x32xf32> to vector<8x1x32xf32>
    %32 = vector.shape_cast %31 : vector<8x1x32xf32> to vector<8x32xf32>
    %33 = arith.addf %28, %32 : vector<8x32xf32>
    %34 = arith.mulf %32, %32 : vector<8x32xf32>
    %35 = arith.addf %30, %34 : vector<8x32xf32>
    %36 = vector.extract_strided_slice %0 {offsets = [0, 7, 0], sizes = [8, 1, 32], strides = [1, 1, 1]} : vector<8x8x32xf32> to vector<8x1x32xf32>
    %37 = vector.shape_cast %36 : vector<8x1x32xf32> to vector<8x32xf32>
    %38 = arith.addf %33, %37 : vector<8x32xf32>
    %39 = arith.mulf %37, %37 : vector<8x32xf32>
    %40 = arith.addf %35, %39 : vector<8x32xf32>
    %cst_3 = arith.constant 1.250000e-01 : f32
    %41 = vector.broadcast %cst_3 : f32 to vector<8x32xf32>
    %42 = arith.mulf %38, %41 : vector<8x32xf32>
    %cst_4 = arith.constant 1.250000e-01 : f32
    %43 = vector.broadcast %cst_4 : f32 to vector<8x32xf32>
    %44 = arith.mulf %40, %43 : vector<8x32xf32>
    %45 = vector.extract_strided_slice %0 {offsets = [0, 0, 0], sizes = [8, 1, 32], strides = [1, 1, 1]} : vector<8x8x32xf32> to vector<8x1x32xf32>
    %46 = vector.shape_cast %45 : vector<8x1x32xf32> to vector<8x32xf32>
    %47 = arith.subf %46, %42 : vector<8x32xf32>
    %48 = arith.mulf %47, %47 : vector<8x32xf32>
    %49 = vector.extract_strided_slice %0 {offsets = [0, 1, 0], sizes = [8, 1, 32], strides = [1, 1, 1]} : vector<8x8x32xf32> to vector<8x1x32xf32>
    %50 = vector.shape_cast %49 : vector<8x1x32xf32> to vector<8x32xf32>
    %51 = arith.subf %50, %42 : vector<8x32xf32>
    %52 = arith.mulf %51, %51 : vector<8x32xf32>
    %53 = arith.addf %48, %52 : vector<8x32xf32>
    %54 = vector.extract_strided_slice %0 {offsets = [0, 2, 0], sizes = [8, 1, 32], strides = [1, 1, 1]} : vector<8x8x32xf32> to vector<8x1x32xf32>
    %55 = vector.shape_cast %54 : vector<8x1x32xf32> to vector<8x32xf32>
    %56 = arith.subf %55, %42 : vector<8x32xf32>
    %57 = arith.mulf %56, %56 : vector<8x32xf32>
    %58 = arith.addf %53, %57 : vector<8x32xf32>
    %59 = vector.extract_strided_slice %0 {offsets = [0, 3, 0], sizes = [8, 1, 32], strides = [1, 1, 1]} : vector<8x8x32xf32> to vector<8x1x32xf32>
    %60 = vector.shape_cast %59 : vector<8x1x32xf32> to vector<8x32xf32>
    %61 = arith.subf %60, %42 : vector<8x32xf32>
    %62 = arith.mulf %61, %61 : vector<8x32xf32>
    %63 = arith.addf %58, %62 : vector<8x32xf32>
    %64 = vector.extract_strided_slice %0 {offsets = [0, 4, 0], sizes = [8, 1, 32], strides = [1, 1, 1]} : vector<8x8x32xf32> to vector<8x1x32xf32>
    %65 = vector.shape_cast %64 : vector<8x1x32xf32> to vector<8x32xf32>
    %66 = arith.subf %65, %42 : vector<8x32xf32>
    %67 = arith.mulf %66, %66 : vector<8x32xf32>
    %68 = arith.addf %63, %67 : vector<8x32xf32>
    %69 = vector.extract_strided_slice %0 {offsets = [0, 5, 0], sizes = [8, 1, 32], strides = [1, 1, 1]} : vector<8x8x32xf32> to vector<8x1x32xf32>
    %70 = vector.shape_cast %69 : vector<8x1x32xf32> to vector<8x32xf32>
    %71 = arith.subf %70, %42 : vector<8x32xf32>
    %72 = arith.mulf %71, %71 : vector<8x32xf32>
    %73 = arith.addf %68, %72 : vector<8x32xf32>
    %74 = vector.extract_strided_slice %0 {offsets = [0, 6, 0], sizes = [8, 1, 32], strides = [1, 1, 1]} : vector<8x8x32xf32> to vector<8x1x32xf32>
    %75 = vector.shape_cast %74 : vector<8x1x32xf32> to vector<8x32xf32>
    %76 = arith.subf %75, %42 : vector<8x32xf32>
    %77 = arith.mulf %76, %76 : vector<8x32xf32>
    %78 = arith.addf %73, %77 : vector<8x32xf32>
    %79 = vector.extract_strided_slice %0 {offsets = [0, 7, 0], sizes = [8, 1, 32], strides = [1, 1, 1]} : vector<8x8x32xf32> to vector<8x1x32xf32>
    %80 = vector.shape_cast %79 : vector<8x1x32xf32> to vector<8x32xf32>
    %81 = arith.subf %80, %42 : vector<8x32xf32>
    %82 = arith.mulf %81, %81 : vector<8x32xf32>
    %83 = arith.addf %78, %82 : vector<8x32xf32>
    %cst_5 = arith.constant 1.250000e-01 : f32
    %84 = vector.broadcast %cst_5 : f32 to vector<8x32xf32>
    %85 = arith.mulf %83, %84 : vector<8x32xf32>
    %86 = arith.subf %1, %2 : vector<8x32xf32>
    %87 = math.sqrt %85 : vector<8x32xf32>
    %88 = math.sqrt %44 : vector<8x32xf32>
    %89 = math.absf %42 : vector<8x32xf32>
    %90 = math.absf %86 : vector<8x32xf32>
    %91 = math.absf %87 : vector<8x32xf32>
    %92 = math.absf %88 : vector<8x32xf32>
    %c0_6 = arith.constant 0 : index
    %c0_7 = arith.constant 0 : index
    %93 = vector.load %arg2[%c0_6, %c0_7] : memref<32x64xf32, #tpu.memory_space<vmem>>, vector<32x64xf32>
    %cst_8 = arith.constant dense<0.000000e+00> : vector<8x64xf32>
    %94 = tpu.matmul %89, %93, %cst_8 {dimension_numbers = #tpu.dot_dimension_numbers<[1], [0], [0], [1], [0, 0, 1, 1], [], []>} : vector<8x32xf32>, vector<32x64xf32>, vector<8x64xf32> -> vector<8x64xf32>
    %c0_9 = arith.constant 0 : index
    %c0_10 = arith.constant 0 : index
    %95 = vector.load %arg3[%c0_9, %c0_10] : memref<1x64xf32, #tpu.memory_space<vmem>>, vector<1x64xf32>
    %96 = vector.broadcast %95 : vector<1x64xf32> to vector<8x64xf32>
    %97 = arith.addf %94, %96 : vector<8x64xf32>
    %cst_11 = arith.constant 0.000000e+00 : f32
    %98 = vector.broadcast %cst_11 : f32 to vector<8x64xf32>
    %99 = arith.maximumf %97, %98 : vector<8x64xf32>
    %c0_12 = arith.constant 0 : index
    %c0_13 = arith.constant 0 : index
    %100 = vector.load %arg4[%c0_12, %c0_13] : memref<64x128xf32, #tpu.memory_space<vmem>>, vector<64x128xf32>
    %cst_14 = arith.constant dense<0.000000e+00> : vector<8x128xf32>
    %101 = tpu.matmul %99, %100, %cst_14 {dimension_numbers = #tpu.dot_dimension_numbers<[1], [0], [0], [1], [0, 0, 1, 1], [], []>} : vector<8x64xf32>, vector<64x128xf32>, vector<8x128xf32> -> vector<8x128xf32>
    %c0_15 = arith.constant 0 : index
    %c0_16 = arith.constant 0 : index
    %102 = vector.load %arg2[%c0_15, %c0_16] : memref<32x64xf32, #tpu.memory_space<vmem>>, vector<32x64xf32>
    %cst_17 = arith.constant dense<0.000000e+00> : vector<8x64xf32>
    %103 = tpu.matmul %90, %102, %cst_17 {dimension_numbers = #tpu.dot_dimension_numbers<[1], [0], [0], [1], [0, 0, 1, 1], [], []>} : vector<8x32xf32>, vector<32x64xf32>, vector<8x64xf32> -> vector<8x64xf32>
    %c0_18 = arith.constant 0 : index
    %c0_19 = arith.constant 0 : index
    %104 = vector.load %arg3[%c0_18, %c0_19] : memref<1x64xf32, #tpu.memory_space<vmem>>, vector<1x64xf32>
    %105 = vector.broadcast %104 : vector<1x64xf32> to vector<8x64xf32>
    %106 = arith.addf %103, %105 : vector<8x64xf32>
    %cst_20 = arith.constant 0.000000e+00 : f32
    %107 = vector.broadcast %cst_20 : f32 to vector<8x64xf32>
    %108 = arith.maximumf %106, %107 : vector<8x64xf32>
    %c0_21 = arith.constant 0 : index
    %c0_22 = arith.constant 0 : index
    %109 = vector.load %arg5[%c0_21, %c0_22] : memref<64x128xf32, #tpu.memory_space<vmem>>, vector<64x128xf32>
    %cst_23 = arith.constant dense<0.000000e+00> : vector<8x128xf32>
    %110 = tpu.matmul %108, %109, %cst_23 {dimension_numbers = #tpu.dot_dimension_numbers<[1], [0], [0], [1], [0, 0, 1, 1], [], []>} : vector<8x64xf32>, vector<64x128xf32>, vector<8x128xf32> -> vector<8x128xf32>
    %111 = arith.addf %101, %110 : vector<8x128xf32>
    %c0_24 = arith.constant 0 : index
    %c0_25 = arith.constant 0 : index
    %112 = vector.load %arg6[%c0_24, %c0_25] : memref<32x64xf32, #tpu.memory_space<vmem>>, vector<32x64xf32>
    %cst_26 = arith.constant dense<0.000000e+00> : vector<8x64xf32>
    %113 = tpu.matmul %89, %112, %cst_26 {dimension_numbers = #tpu.dot_dimension_numbers<[1], [0], [0], [1], [0, 0, 1, 1], [], []>} : vector<8x32xf32>, vector<32x64xf32>, vector<8x64xf32> -> vector<8x64xf32>
    %c0_27 = arith.constant 0 : index
    %c0_28 = arith.constant 0 : index
    %114 = vector.load %arg7[%c0_27, %c0_28] : memref<32x64xf32, #tpu.memory_space<vmem>>, vector<32x64xf32>
    %cst_29 = arith.constant dense<0.000000e+00> : vector<8x64xf32>
    %115 = tpu.matmul %91, %114, %cst_29 {dimension_numbers = #tpu.dot_dimension_numbers<[1], [0], [0], [1], [0, 0, 1, 1], [], []>} : vector<8x32xf32>, vector<32x64xf32>, vector<8x64xf32> -> vector<8x64xf32>
    %116 = arith.addf %113, %115 : vector<8x64xf32>
    %c0_30 = arith.constant 0 : index
    %c0_31 = arith.constant 0 : index
    %117 = vector.load %arg8[%c0_30, %c0_31] : memref<1x64xf32, #tpu.memory_space<vmem>>, vector<1x64xf32>
    %118 = vector.broadcast %117 : vector<1x64xf32> to vector<8x64xf32>
    %119 = arith.addf %116, %118 : vector<8x64xf32>
    %cst_32 = arith.constant 0.000000e+00 : f32
    %120 = vector.broadcast %cst_32 : f32 to vector<8x64xf32>
    %121 = arith.maximumf %119, %120 : vector<8x64xf32>
    %c0_33 = arith.constant 0 : index
    %c0_34 = arith.constant 0 : index
    %122 = vector.load %arg9[%c0_33, %c0_34] : memref<64x128xf32, #tpu.memory_space<vmem>>, vector<64x128xf32>
    %cst_35 = arith.constant dense<0.000000e+00> : vector<8x128xf32>
    %123 = tpu.matmul %121, %122, %cst_35 {dimension_numbers = #tpu.dot_dimension_numbers<[1], [0], [0], [1], [0, 0, 1, 1], [], []>} : vector<8x64xf32>, vector<64x128xf32>, vector<8x128xf32> -> vector<8x128xf32>
    %124 = arith.addf %111, %123 : vector<8x128xf32>
    %c0_36 = arith.constant 0 : index
    %c0_37 = arith.constant 0 : index
    %125 = vector.load %arg6[%c0_36, %c0_37] : memref<32x64xf32, #tpu.memory_space<vmem>>, vector<32x64xf32>
    %cst_38 = arith.constant dense<0.000000e+00> : vector<8x64xf32>
    %126 = tpu.matmul %92, %125, %cst_38 {dimension_numbers = #tpu.dot_dimension_numbers<[1], [0], [0], [1], [0, 0, 1, 1], [], []>} : vector<8x32xf32>, vector<32x64xf32>, vector<8x64xf32> -> vector<8x64xf32>
    %c0_39 = arith.constant 0 : index
    %c0_40 = arith.constant 0 : index
    %127 = vector.load %arg7[%c0_39, %c0_40] : memref<32x64xf32, #tpu.memory_space<vmem>>, vector<32x64xf32>
    %cst_41 = arith.constant dense<0.000000e+00> : vector<8x64xf32>
    %128 = tpu.matmul %90, %127, %cst_41 {dimension_numbers = #tpu.dot_dimension_numbers<[1], [0], [0], [1], [0, 0, 1, 1], [], []>} : vector<8x32xf32>, vector<32x64xf32>, vector<8x64xf32> -> vector<8x64xf32>
    %129 = arith.addf %126, %128 : vector<8x64xf32>
    %c0_42 = arith.constant 0 : index
    %c0_43 = arith.constant 0 : index
    %130 = vector.load %arg8[%c0_42, %c0_43] : memref<1x64xf32, #tpu.memory_space<vmem>>, vector<1x64xf32>
    %131 = vector.broadcast %130 : vector<1x64xf32> to vector<8x64xf32>
    %132 = arith.addf %129, %131 : vector<8x64xf32>
    %cst_44 = arith.constant 0.000000e+00 : f32
    %133 = vector.broadcast %cst_44 : f32 to vector<8x64xf32>
    %134 = arith.maximumf %132, %133 : vector<8x64xf32>
    %c0_45 = arith.constant 0 : index
    %c0_46 = arith.constant 0 : index
    %135 = vector.load %arg10[%c0_45, %c0_46] : memref<64x128xf32, #tpu.memory_space<vmem>>, vector<64x128xf32>
    %cst_47 = arith.constant dense<0.000000e+00> : vector<8x128xf32>
    %136 = tpu.matmul %134, %135, %cst_47 {dimension_numbers = #tpu.dot_dimension_numbers<[1], [0], [0], [1], [0, 0, 1, 1], [], []>} : vector<8x64xf32>, vector<64x128xf32>, vector<8x128xf32> -> vector<8x128xf32>
    %137 = arith.addf %124, %136 : vector<8x128xf32>
    %c0_48 = arith.constant 0 : index
    %c0_49 = arith.constant 0 : index
    %138 = vector.load %arg11[%c0_48, %c0_49] : memref<32x128xf32, #tpu.memory_space<vmem>>, vector<32x128xf32>
    %cst_50 = arith.constant dense<0.000000e+00> : vector<8x128xf32>
    %139 = tpu.matmul %91, %138, %cst_50 {dimension_numbers = #tpu.dot_dimension_numbers<[1], [0], [0], [1], [0, 0, 1, 1], [], []>} : vector<8x32xf32>, vector<32x128xf32>, vector<8x128xf32> -> vector<8x128xf32>
    %140 = arith.addf %137, %139 : vector<8x128xf32>
    %c0_51 = arith.constant 0 : index
    %c0_52 = arith.constant 0 : index
    %141 = vector.load %arg12[%c0_51, %c0_52] : memref<1x128xf32, #tpu.memory_space<vmem>>, vector<1x128xf32>
    %142 = vector.broadcast %141 : vector<1x128xf32> to vector<8x128xf32>
    %143 = arith.addf %140, %142 : vector<8x128xf32>
    %c0_53 = arith.constant 0 : index
    %c0_54 = arith.constant 0 : index
    %144 = vector.load %arg13[%c0_53, %c0_54] : memref<8x128xf32, #tpu.memory_space<vmem>>, vector<8x128xf32>
    tpu.vector_store %arg13[%c0_53, %c0_54], %143 {strides = array<i32>} : memref<8x128xf32, #tpu.memory_space<vmem>>, vector<8x128xf32>,
    return
  }
  func.func @transform_0(%arg0: i32) -> (i32, i32, i32) {
    %c0_i32 = arith.constant 0 : i32
    %c0_i32_0 = arith.constant 0 : i32
    %c0_i32_1 = arith.constant 0 : i32
    return %arg0, %c0_i32, %c0_i32_0 : i32, i32, i32
  }
  func.func @transform_1(%arg0: i32) -> (i32, i32) {
    %c0_i32 = arith.constant 0 : i32
    %c0_i32_0 = arith.constant 0 : i32
    %c0_i32_1 = arith.constant 0 : i32
    return %c0_i32, %c0_i32_0 : i32, i32
  }
  func.func @transform_2(%arg0: i32) -> (i32, i32) {
    %c0_i32 = arith.constant 0 : i32
    %c0_i32_0 = arith.constant 0 : i32
    %c0_i32_1 = arith.constant 0 : i32
    return %c0_i32, %c0_i32_0 : i32, i32
  }
  func.func @transform_3(%arg0: i32) -> (i32, i32) {
    %c0_i32 = arith.constant 0 : i32
    %c0_i32_0 = arith.constant 0 : i32
    %c0_i32_1 = arith.constant 0 : i32
    return %c0_i32, %c0_i32_0 : i32, i32
  }
  func.func @transform_4(%arg0: i32) -> (i32, i32) {
    %c0_i32 = arith.constant 0 : i32
    %c0_i32_0 = arith.constant 0 : i32
    %c0_i32_1 = arith.constant 0 : i32
    return %c0_i32, %c0_i32_0 : i32, i32
  }
  func.func @transform_5(%arg0: i32) -> (i32, i32) {
    %c0_i32 = arith.constant 0 : i32
    %c0_i32_0 = arith.constant 0 : i32
    %c0_i32_1 = arith.constant 0 : i32
    return %c0_i32, %c0_i32_0 : i32, i32
  }
  func.func @transform_6(%arg0: i32) -> (i32, i32) {
    %c0_i32 = arith.constant 0 : i32
    %c0_i32_0 = arith.constant 0 : i32
    %c0_i32_1 = arith.constant 0 : i32
    return %c0_i32, %c0_i32_0 : i32, i32
  }
  func.func @transform_7(%arg0: i32) -> (i32, i32) {
    %c0_i32 = arith.constant 0 : i32
    %c0_i32_0 = arith.constant 0 : i32
    %c0_i32_1 = arith.constant 0 : i32
    return %c0_i32, %c0_i32_0 : i32, i32
  }
  func.func @transform_8(%arg0: i32) -> (i32, i32) {
    %c0_i32 = arith.constant 0 : i32
    %c0_i32_0 = arith.constant 0 : i32
    %c0_i32_1 = arith.constant 0 : i32
    return %c0_i32, %c0_i32_0 : i32, i32
  }
  func.func @transform_9(%arg0: i32) -> (i32, i32) {
    %c0_i32 = arith.constant 0 : i32
    %c0_i32_0 = arith.constant 0 : i32
    %c0_i32_1 = arith.constant 0 : i32
    return %c0_i32, %c0_i32_0 : i32, i32
  }
  func.func @transform_10(%arg0: i32) -> (i32, i32) {
    %c0_i32 = arith.constant 0 : i32
    %c0_i32_0 = arith.constant 0 : i32
    %c0_i32_1 = arith.constant 0 : i32
    return %c0_i32, %c0_i32_0 : i32, i32
  }
  func.func @transform_11(%arg0: i32) -> (i32, i32) {
    %c0_i32 = arith.constant 0 : i32
    %c0_i32_0 = arith.constant 0 : i32
    %c0_i32_1 = arith.constant 0 : i32
    return %c0_i32, %c0_i32_0 : i32, i32
  }
  func.func @transform_12(%arg0: i32) -> (i32, i32) {
    %c0_i32 = arith.constant 0 : i32
    %c0_i32_0 = arith.constant 0 : i32
    return %arg0, %c0_i32 : i32, i32
  }
}

</mosaic_0001>

<llo_original>
// kernel: tpu_custom_call.1
$region0: #{tpu_custom_call.1}
  #allocation0 [shape = 'u32[]', space=smem, size = 0x4, offset = 0x4, fixed_abs, tag = 'smem constant byte address 0x4 - core index']
  #allocation1 [shape = 'u32[144,128]{1,0:T(1,128)}', space=vmem, size = 0x12000, scoped, tag = 'internal scratch']
  %s0 = inlined_call_operand.hbm [shape: f32[8,8,32], index: 0, kind: input, shape index: {}]
  %s1 = inlined_call_operand.hbm [shape: f32[32,64], index: 1, kind: input, shape index: {}]
  %s2 = inlined_call_operand.vmem [shape: f32[1,64], index: 2, kind: input, shape index: {}]
  %s3 = inlined_call_operand.hbm [shape: f32[64,128], index: 3, kind: input, shape index: {}]
  %s4 = inlined_call_operand.hbm [shape: f32[64,128], index: 4, kind: input, shape index: {}]
  %s5 = inlined_call_operand.hbm [shape: f32[32,64], index: 5, kind: input, shape index: {}]
  %s6 = inlined_call_operand.hbm [shape: f32[32,64], index: 6, kind: input, shape index: {}]
  %s7 = inlined_call_operand.vmem [shape: f32[1,64], index: 7, kind: input, shape index: {}]
  %s8 = inlined_call_operand.hbm [shape: f32[64,128], index: 8, kind: input, shape index: {}]
  %s9 = inlined_call_operand.hbm [shape: f32[64,128], index: 9, kind: input, shape index: {}]
  %s10 = inlined_call_operand.vmem [shape: f32[32,128], index: 10, kind: input, shape index: {}]
  %s11 = inlined_call_operand.vmem [shape: f32[1,128], index: 11, kind: input, shape index: {}]
  %s12 = inlined_call_operand.hbm [shape: f32[8,128], index: 12, kind: output, shape index: {}]
  %s13 = sld [smem:[#allocation0]]
  $region90: #{tpu_custom_call.1} parent=0
    _
  %s15 = ssub.s32 1, %s13
  %s16 = scalar_select 0, %s15, %s13
  $region1: #{tpu_custom_call.1} parent=0
    #allocation2 [shape = 'u8[32768]{0}', space=vmem, size = 0x8000, scoped, tag = 'input window, operand 0, single buffered']
    #allocation3 [shape = 's32[1]{0}', space=sflag, size = 0x4, scoped, tag = 'scoped memory for tpu_custom_call.1']
    #allocation4 [shape = 's32[1]{0}', space=sflag, size = 0x4, scoped, tag = 'scoped memory for tpu_custom_call.1']
    #allocation5 [shape = 'u8[16384]{0}', space=vmem, size = 0x4000, scoped, tag = 'input window, operand 1, single buffered']
    #allocation6 [shape = 's32[1]{0}', space=sflag, size = 0x4, scoped, tag = 'scoped memory for tpu_custom_call.1']
    #allocation7 [shape = 'u8[32768]{0}', space=vmem, size = 0x8000, scoped, tag = 'input window, operand 3, single buffered']
    #allocation8 [shape = 'u8[32768]{0}', space=vmem, size = 0x8000, scoped, tag = 'input window, operand 4, single buffered']
    #allocation9 [shape = 's32[1]{0}', space=sflag, size = 0x4, scoped, tag = 'scoped memory for tpu_custom_call.1']
    #allocation10 [shape = 'u8[16384]{0}', space=vmem, size = 0x4000, scoped, tag = 'input window, operand 5, single buffered']
    #allocation11 [shape = 'u8[16384]{0}', space=vmem, size = 0x4000, scoped, tag = 'input window, operand 6, single buffered']
    #allocation12 [shape = 's32[1]{0}', space=sflag, size = 0x4, scoped, tag = 'scoped memory for tpu_custom_call.1']
    #allocation13 [shape = 'u8[32768]{0}', space=vmem, size = 0x8000, scoped, tag = 'input window, operand 8, single buffered']
    #allocation14 [shape = 'u8[32768]{0}', space=vmem, size = 0x8000, scoped, tag = 'input window, operand 9, single buffered']
    #allocation15 [shape = 's32[1]{0}', space=sflag, size = 0x4, scoped, tag = 'scoped memory for tpu_custom_call.1']
    #allocation16 [shape = 'u8[4096]{0}', space=vmem, size = 0x1000, scoped, tag = 'output window, operand 0, single buffered']
    %17 = vsyncpa [#allocation3], 0
    %18 = vsyncpa [#allocation6], 0
    %19 = vsyncpa [#allocation9], 0
    %20 = vsyncpa [#allocation12], 0
    %21 = vsyncpa [#allocation15], 0
    %22 = vsyncpa [#allocation4], 0
    // Predicated region
    $region2: #{tpu_custom_call.1} parent=1 // pred_check
      _
    $region3: #{tpu_custom_call.1} parent=1 // pred_check_branch
      %24 = sbr.rel (0) target = $region5
    $region4: #{tpu_custom_call.1} parent=1 // pred_region
      %s26 = ssub.s32 1024, 1024
      %27 = vsyncadd [#allocation3], %s26
      %s28 = sshll.u32 [#allocation2], 4
      %s29 = int_to_ptr.vmem [resolvable:$true] %s28
      %34 = dma.hbm_to_vmem [thread:$0]  %s0, 1024, %s29, [#allocation3], 128, 128, 8
    $region5: #{tpu_custom_call.1} parent=1 // pred_fallthru
      _
    // Predicated region
    $region6: #{tpu_custom_call.1} parent=1 // pred_check
      _
    $region7: #{tpu_custom_call.1} parent=1 // pred_check_branch
      %36 = sbr.rel (0) target = $region9
    $region8: #{tpu_custom_call.1} parent=1 // pred_region
      %s38 = ssub.s32 512, 512
      %39 = vsyncadd [#allocation6], %s38
      %s40 = sshll.u32 [#allocation5], 4
      %s41 = int_to_ptr.vmem [resolvable:$true] %s40
      %46 = dma.hbm_to_vmem [thread:$0]  %s1, 512, %s41, [#allocation6], 128, 128, 8
    $region9: #{tpu_custom_call.1} parent=1 // pred_fallthru
      _
    // Predicated region
    $region10: #{tpu_custom_call.1} parent=1 // pred_check
      _
    $region11: #{tpu_custom_call.1} parent=1 // pred_check_branch
      %48 = sbr.rel (0) target = $region13
    $region12: #{tpu_custom_call.1} parent=1 // pred_region
      _
    $region13: #{tpu_custom_call.1} parent=1 // pred_fallthru
      _
    // Predicated region
    $region14: #{tpu_custom_call.1} parent=1 // pred_check
      _
    $region15: #{tpu_custom_call.1} parent=1 // pred_check_branch
      %50 = sbr.rel (0) target = $region17
    $region16: #{tpu_custom_call.1} parent=1 // pred_region
      %s52 = ssub.s32 1024, 1024
      %53 = vsyncadd [#allocation6], %s52
      %s54 = sshll.u32 [#allocation7], 4
      %s55 = int_to_ptr.vmem [resolvable:$true] %s54
      %60 = dma.hbm_to_vmem [thread:$0]  %s3, 1024, %s55, [#allocation6], 128, 128, 8
    $region17: #{tpu_custom_call.1} parent=1 // pred_fallthru
      _
    // Predicated region
    $region18: #{tpu_custom_call.1} parent=1 // pred_check
      _
    $region19: #{tpu_custom_call.1} parent=1 // pred_check_branch
      %62 = sbr.rel (0) target = $region21
    $region20: #{tpu_custom_call.1} parent=1 // pred_region
      %s64 = ssub.s32 1024, 1024
      %65 = vsyncadd [#allocation9], %s64
      %s66 = sshll.u32 [#allocation8], 4
      %s67 = int_to_ptr.vmem [resolvable:$true] %s66
      %72 = dma.hbm_to_vmem [thread:$0]  %s4, 1024, %s67, [#allocation9], 128, 128, 8
    $region21: #{tpu_custom_call.1} parent=1 // pred_fallthru
      _
    // Predicated region
    $region22: #{tpu_custom_call.1} parent=1 // pred_check
      _
    $region23: #{tpu_custom_call.1} parent=1 // pred_check_branch
      %74 = sbr.rel (0) target = $region25
    $region24: #{tpu_custom_call.1} parent=1 // pred_region
      %s76 = ssub.s32 512, 512
      %77 = vsyncadd [#allocation9], %s76
      %s78 = sshll.u32 [#allocation10], 4
      %s79 = int_to_ptr.vmem [resolvable:$true] %s78
      %84 = dma.hbm_to_vmem [thread:$0]  %s5, 512, %s79, [#allocation9], 128, 128, 8
    $region25: #{tpu_custom_call.1} parent=1 // pred_fallthru
      _
    // Predicated region
    $region26: #{tpu_custom_call.1} parent=1 // pred_check
      _
    $region27: #{tpu_custom_call.1} parent=1 // pred_check_branch
      %86 = sbr.rel (0) target = $region29
    $region28: #{tpu_custom_call.1} parent=1 // pred_region
      %s88 = ssub.s32 512, 512
      %89 = vsyncadd [#allocation12], %s88
      %s90 = sshll.u32 [#allocation11], 4
      %s91 = int_to_ptr.vmem [resolvable:$true] %s90
      %96 = dma.hbm_to_vmem [thread:$0]  %s6, 512, %s91, [#allocation12], 128, 128, 8
    $region29: #{tpu_custom_call.1} parent=1 // pred_fallthru
      _
    // Predicated region
    $region30: #{tpu_custom_call.1} parent=1 // pred_check
      _
    $region31: #{tpu_custom_call.1} parent=1 // pred_check_branch
      %98 = sbr.rel (0) target = $region33
    $region32: #{tpu_custom_call.1} parent=1 // pred_region
      _
    $region33: #{tpu_custom_call.1} parent=1 // pred_fallthru
      _
    // Predicated region
    $region34: #{tpu_custom_call.1} parent=1 // pred_check
      _
    $region35: #{tpu_custom_call.1} parent=1 // pred_check_branch
      %100 = sbr.rel (0) target = $region37
    $region36: #{tpu_custom_call.1} parent=1 // pred_region
      %s102 = ssub.s32 1024, 1024
      %103 = vsyncadd [#allocation12], %s102
      %s104 = sshll.u32 [#allocation13], 4
      %s105 = int_to_ptr.vmem [resolvable:$true] %s104
      %110 = dma.hbm_to_vmem [thread:$0]  %s8, 1024, %s105, [#allocation12], 128, 128, 8
    $region37: #{tpu_custom_call.1} parent=1 // pred_fallthru
      _
    // Predicated region
    $region38: #{tpu_custom_call.1} parent=1 // pred_check
      _
    $region39: #{tpu_custom_call.1} parent=1 // pred_check_branch
      %112 = sbr.rel (0) target = $region41
    $region40: #{tpu_custom_call.1} parent=1 // pred_region
      %s114 = ssub.s32 1024, 1024
      %115 = vsyncadd [#allocation15], %s114
      %s116 = sshll.u32 [#allocation14], 4
      %s117 = int_to_ptr.vmem [resolvable:$true] %s116
      %122 = dma.hbm_to_vmem [thread:$0]  %s9, 1024, %s117, [#allocation15], 128, 128, 8
    $region41: #{tpu_custom_call.1} parent=1 // pred_fallthru
      _
    // Predicated region
    $region42: #{tpu_custom_call.1} parent=1 // pred_check
      _
    $region43: #{tpu_custom_call.1} parent=1 // pred_check_branch
      %124 = sbr.rel (0) target = $region45
    $region44: #{tpu_custom_call.1} parent=1 // pred_region
      _
    $region45: #{tpu_custom_call.1} parent=1 // pred_fallthru
      _
    // Predicated region
    $region46: #{tpu_custom_call.1} parent=1 // pred_check
      _
    $region47: #{tpu_custom_call.1} parent=1 // pred_check_branch
      %126 = sbr.rel (0) target = $region49
    $region48: #{tpu_custom_call.1} parent=1 // pred_region
      _
    $region49: #{tpu_custom_call.1} parent=1 // pred_fallthru
      _
    // Predicated region
    $region50: #{tpu_custom_call.1} parent=1 // pred_check
      _
    $region51: #{tpu_custom_call.1} parent=1 // pred_check_branch
      %128 = sbr.rel (0) target = $region53
    $region52: #{tpu_custom_call.1} parent=1 // pred_region
      %129 = dma.done [#allocation3], 1024
    $region53: #{tpu_custom_call.1} parent=1 // pred_fallthru
      _
    // Predicated region
    $region54: #{tpu_custom_call.1} parent=1 // pred_check
      _
    $region55: #{tpu_custom_call.1} parent=1 // pred_check_branch
      %131 = sbr.rel (0) target = $region57
    $region56: #{tpu_custom_call.1} parent=1 // pred_region
      %132 = dma.done [#allocation6], 512
    $region57: #{tpu_custom_call.1} parent=1 // pred_fallthru
      _
    // Predicated region
    $region58: #{tpu_custom_call.1} parent=1 // pred_check
      _
    $region59: #{tpu_custom_call.1} parent=1 // pred_check_branch
      %134 = sbr.rel (0) target = $region61
    $region60: #{tpu_custom_call.1} parent=1 // pred_region
      %135 = dma.done [#allocation6], 1024
    $region61: #{tpu_custom_call.1} parent=1 // pred_fallthru
      _
    // Predicated region
    $region62: #{tpu_custom_call.1} parent=1 // pred_check
      _
    $region63: #{tpu_custom_call.1} parent=1 // pred_check_branch
      %137 = sbr.rel (0) target = $region65
    $region64: #{tpu_custom_call.1} parent=1 // pred_region
      %138 = dma.done [#allocation9], 1024
    $region65: #{tpu_custom_call.1} parent=1 // pred_fallthru
      _
    // Predicated region
    $region66: #{tpu_custom_call.1} parent=1 // pred_check
      _
    $region67: #{tpu_custom_call.1} parent=1 // pred_check_branch
      %140 = sbr.rel (0) target = $region69
    $region68: #{tpu_custom_call.1} parent=1 // pred_region
      %141 = dma.done [#allocation9], 512
    $region69: #{tpu_custom_call.1} parent=1 // pred_fallthru
      _
    // Predicated region
    $region70: #{tpu_custom_call.1} parent=1 // pred_check
      _
    $region71: #{tpu_custom_call.1} parent=1 // pred_check_branch
      %143 = sbr.rel (0) target = $region73
    $region72: #{tpu_custom_call.1} parent=1 // pred_region
      %144 = dma.done [#allocation12], 512
    $region73: #{tpu_custom_call.1} parent=1 // pred_fallthru
      _
    // Predicated region
    $region74: #{tpu_custom_call.1} parent=1 // pred_check
      _
    $region75: #{tpu_custom_call.1} parent=1 // pred_check_branch
      %146 = sbr.rel (0) target = $region77
    $region76: #{tpu_custom_call.1} parent=1 // pred_region
      %147 = dma.done [#allocation12], 1024
    $region77: #{tpu_custom_call.1} parent=1 // pred_fallthru
      _
    // Predicated region
    $region78: #{tpu_custom_call.1} parent=1 // pred_check
      _
    $region79: #{tpu_custom_call.1} parent=1 // pred_check_branch
      %149 = sbr.rel (0) target = $region81
    $region80: #{tpu_custom_call.1} parent=1 // pred_region
      %150 = dma.done [#allocation15], 1024
    $region81: #{tpu_custom_call.1} parent=1 // pred_fallthru
      _
    %v151 = vld [vmem:[#allocation2] sm:$0xff]
    %v152 = vld [vmem:[#allocation2 + $0x8] sm:$0xff]
    %v153 = vld [vmem:[#allocation2 + $0x10] sm:$0xff]
    %v154 = vld [vmem:[#allocation2 + $0x18] sm:$0xff]
    %v155 = vld [vmem:[#allocation2 + $0x20] sm:$0xff]
    %v156 = vld [vmem:[#allocation2 + $0x28] sm:$0xff]
    %v157 = vld [vmem:[#allocation2 + $0x30] sm:$0xff]
    %v158 = vld [vmem:[#allocation2 + $0x38] sm:$0xff]
    %vm159 = vcmask 261120
    %v160 = vsel %vm159, %v151, -inf
    %v161 = vrot.slane %v160, 4
    %v162 = vmax.f32 %v160, %v161
    %v163 = vrot.slane %v162, 2
    %v164 = vmax.f32 %v162, %v163
    %v165 = vrot.slane %v164, 1
    %v166 = vmax.f32 %v164, %v165
    %v167 = vsel %vm159, %v152, -inf
    %v168 = vrot.slane %v167, 4
    %v169 = vmax.f32 %v167, %v168
    %v170 = vrot.slane %v169, 2
    %v171 = vmax.f32 %v169, %v170
    %v172 = vrot.slane %v171, 1
    %v173 = vmax.f32 %v171, %v172
    %v174 = vsel %vm159, %v153, -inf
    %v175 = vrot.slane %v174, 4
    %v176 = vmax.f32 %v174, %v175
    %v177 = vrot.slane %v176, 2
    %v178 = vmax.f32 %v176, %v177
    %v179 = vrot.slane %v178, 1
    %v180 = vmax.f32 %v178, %v179
    %v181 = vsel %vm159, %v154, -inf
    %v182 = vrot.slane %v181, 4
    %v183 = vmax.f32 %v181, %v182
    %v184 = vrot.slane %v183, 2
    %v185 = vmax.f32 %v183, %v184
    %v186 = vrot.slane %v185, 1
    %v187 = vmax.f32 %v185, %v186
    %v188 = vsel %vm159, %v155, -inf
    %v189 = vrot.slane %v188, 4
    %v190 = vmax.f32 %v188, %v189
    %v191 = vrot.slane %v190, 2
    %v192 = vmax.f32 %v190, %v191
    %v193 = vrot.slane %v192, 1
    %v194 = vmax.f32 %v192, %v193
    %v195 = vsel %vm159, %v156, -inf
    %v196 = vrot.slane %v195, 4
    %v197 = vmax.f32 %v195, %v196
    %v198 = vrot.slane %v197, 2
    %v199 = vmax.f32 %v197, %v198
    %v200 = vrot.slane %v199, 1
    %v201 = vmax.f32 %v199, %v200
    %v202 = vsel %vm159, %v157, -inf
    %v203 = vrot.slane %v202, 4
    %v204 = vmax.f32 %v202, %v203
    %v205 = vrot.slane %v204, 2
    %v206 = vmax.f32 %v204, %v205
    %v207 = vrot.slane %v206, 1
    %v208 = vmax.f32 %v206, %v207
    %v209 = vsel %vm159, %v158, -inf
    %v210 = vrot.slane %v209, 4
    %v211 = vmax.f32 %v209, %v210
    %v212 = vrot.slane %v211, 2
    %v213 = vmax.f32 %v211, %v212
    %v214 = vrot.slane %v213, 1
    %v215 = vmax.f32 %v213, %v214
    %v216 = vsel %vm159, %v151, inf
    %v217 = vrot.slane %v216, 4
    %v218 = vmin.f32 %v216, %v217
    %v219 = vrot.slane %v218, 2
    %v220 = vmin.f32 %v218, %v219
    %v221 = vrot.slane %v220, 1
    %v222 = vmin.f32 %v220, %v221
    %v223 = vsel %vm159, %v152, inf
    %v224 = vrot.slane %v223, 4
    %v225 = vmin.f32 %v223, %v224
    %v226 = vrot.slane %v225, 2
    %v227 = vmin.f32 %v225, %v226
    %v228 = vrot.slane %v227, 1
    %v229 = vmin.f32 %v227, %v228
    %v230 = vsel %vm159, %v153, inf
    %v231 = vrot.slane %v230, 4
    %v232 = vmin.f32 %v230, %v231
    %v233 = vrot.slane %v232, 2
    %v234 = vmin.f32 %v232, %v233
    %v235 = vrot.slane %v234, 1
    %v236 = vmin.f32 %v234, %v235
    %v237 = vsel %vm159, %v154, inf
    %v238 = vrot.slane %v237, 4
    %v239 = vmin.f32 %v237, %v238
    %v240 = vrot.slane %v239, 2
    %v241 = vmin.f32 %v239, %v240
    %v242 = vrot.slane %v241, 1
    %v243 = vmin.f32 %v241, %v242
    %v244 = vsel %vm159, %v155, inf
    %v245 = vrot.slane %v244, 4
    %v246 = vmin.f32 %v244, %v245
    %v247 = vrot.slane %v246, 2
    %v248 = vmin.f32 %v246, %v247
    %v249 = vrot.slane %v248, 1
    %v250 = vmin.f32 %v248, %v249
    %v251 = vsel %vm159, %v156, inf
    %v252 = vrot.slane %v251, 4
    %v253 = vmin.f32 %v251, %v252
    %v254 = vrot.slane %v253, 2
    %v255 = vmin.f32 %v253, %v254
    %v256 = vrot.slane %v255, 1
    %v257 = vmin.f32 %v255, %v256
    %v258 = vsel %vm159, %v157, inf
    %v259 = vrot.slane %v258, 4
    %v260 = vmin.f32 %v258, %v259
    %v261 = vrot.slane %v260, 2
    %v262 = vmin.f32 %v260, %v261
    %v263 = vrot.slane %v262, 1
    %v264 = vmin.f32 %v262, %v263
    %v265 = vsel %vm159, %v158, inf
    %v266 = vrot.slane %v265, 4
    %v267 = vmin.f32 %v265, %v266
    %v268 = vrot.slane %v267, 2
    %v269 = vmin.f32 %v267, %v268
    %v270 = vrot.slane %v269, 1
    %v271 = vmin.f32 %v269, %v270
    %v272 = vmul.f32 %v151, %v151
    %v273 = vmul.f32 %v152, %v152
    %v274 = vmul.f32 %v153, %v153
    %v275 = vmul.f32 %v154, %v154
    %v276 = vmul.f32 %v155, %v155
    %v277 = vmul.f32 %v156, %v156
    %v278 = vmul.f32 %v157, %v157
    %v279 = vmul.f32 %v158, %v158
    %v288 = vrot.slane %v151, 1
    %v289 = vrot.slane %v152, 1
    %v290 = vrot.slane %v153, 1
    %v291 = vrot.slane %v154, 1
    %v292 = vrot.slane %v155, 1
    %v293 = vrot.slane %v156, 1
    %v294 = vrot.slane %v157, 1
    %v295 = vrot.slane %v158, 1
    %v304 = vadd.f32 %v151, %v288
    %v305 = vadd.f32 %v152, %v289
    %v306 = vadd.f32 %v153, %v290
    %v307 = vadd.f32 %v154, %v291
    %v308 = vadd.f32 %v155, %v292
    %v309 = vadd.f32 %v156, %v293
    %v310 = vadd.f32 %v157, %v294
    %v311 = vadd.f32 %v158, %v295
    %v320 = vrot.slane %v272, 1
    %v321 = vrot.slane %v273, 1
    %v322 = vrot.slane %v274, 1
    %v323 = vrot.slane %v275, 1
    %v324 = vrot.slane %v276, 1
    %v325 = vrot.slane %v277, 1
    %v326 = vrot.slane %v278, 1
    %v327 = vrot.slane %v279, 1
    %v336 = vadd.f32 %v272, %v320
    %v337 = vadd.f32 %v273, %v321
    %v338 = vadd.f32 %v274, %v322
    %v339 = vadd.f32 %v275, %v323
    %v340 = vadd.f32 %v276, %v324
    %v341 = vadd.f32 %v277, %v325
    %v342 = vadd.f32 %v278, %v326
    %v343 = vadd.f32 %v279, %v327
    %v344 = vrot.slane %v151, 2
    %v345 = vrot.slane %v152, 2
    %v346 = vrot.slane %v153, 2
    %v347 = vrot.slane %v154, 2
    %v348 = vrot.slane %v155, 2
    %v349 = vrot.slane %v156, 2
    %v350 = vrot.slane %v157, 2
    %v351 = vrot.slane %v158, 2
    %v360 = vadd.f32 %v304, %v344
    %v361 = vadd.f32 %v305, %v345
    %v362 = vadd.f32 %v306, %v346
    %v363 = vadd.f32 %v307, %v347
    %v364 = vadd.f32 %v308, %v348
    %v365 = vadd.f32 %v309, %v349
    %v366 = vadd.f32 %v310, %v350
    %v367 = vadd.f32 %v311, %v351
    %v368 = vrot.slane %v272, 2
    %v369 = vrot.slane %v273, 2
    %v370 = vrot.slane %v274, 2
    %v371 = vrot.slane %v275, 2
    %v372 = vrot.slane %v276, 2
    %v373 = vrot.slane %v277, 2
    %v374 = vrot.slane %v278, 2
    %v375 = vrot.slane %v279, 2
    %v384 = vadd.f32 %v336, %v368
    %v385 = vadd.f32 %v337, %v369
    %v386 = vadd.f32 %v338, %v370
    %v387 = vadd.f32 %v339, %v371
    %v388 = vadd.f32 %v340, %v372
    %v389 = vadd.f32 %v341, %v373
    %v390 = vadd.f32 %v342, %v374
    %v391 = vadd.f32 %v343, %v375
    %v392 = vrot.slane %v151, 3
    %v393 = vrot.slane %v152, 3
    %v394 = vrot.slane %v153, 3
    %v395 = vrot.slane %v154, 3
    %v396 = vrot.slane %v155, 3
    %v397 = vrot.slane %v156, 3
    %v398 = vrot.slane %v157, 3
    %v399 = vrot.slane %v158, 3
    %v408 = vadd.f32 %v360, %v392
    %v409 = vadd.f32 %v361, %v393
    %v410 = vadd.f32 %v362, %v394
    %v411 = vadd.f32 %v363, %v395
    %v412 = vadd.f32 %v364, %v396
    %v413 = vadd.f32 %v365, %v397
    %v414 = vadd.f32 %v366, %v398
    %v415 = vadd.f32 %v367, %v399
    %v416 = vrot.slane %v272, 3
    %v417 = vrot.slane %v273, 3
    %v418 = vrot.slane %v274, 3
    %v419 = vrot.slane %v275, 3
    %v420 = vrot.slane %v276, 3
    %v421 = vrot.slane %v277, 3
    %v422 = vrot.slane %v278, 3
    %v423 = vrot.slane %v279, 3
    %v432 = vadd.f32 %v384, %v416
    %v433 = vadd.f32 %v385, %v417
    %v434 = vadd.f32 %v386, %v418
    %v435 = vadd.f32 %v387, %v419
    %v436 = vadd.f32 %v388, %v420
    %v437 = vadd.f32 %v389, %v421
    %v438 = vadd.f32 %v390, %v422
    %v439 = vadd.f32 %v391, %v423
    %v440 = vrot.slane %v151, 4
    %v441 = vrot.slane %v152, 4
    %v442 = vrot.slane %v153, 4
    %v443 = vrot.slane %v154, 4
    %v444 = vrot.slane %v155, 4
    %v445 = vrot.slane %v156, 4
    %v446 = vrot.slane %v157, 4
    %v447 = vrot.slane %v158, 4
    %v456 = vadd.f32 %v408, %v440
    %v457 = vadd.f32 %v409, %v441
    %v458 = vadd.f32 %v410, %v442
    %v459 = vadd.f32 %v411, %v443
    %v460 = vadd.f32 %v412, %v444
    %v461 = vadd.f32 %v413, %v445
    %v462 = vadd.f32 %v414, %v446
    %v463 = vadd.f32 %v415, %v447
    %v464 = vrot.slane %v272, 4
    %v465 = vrot.slane %v273, 4
    %v466 = vrot.slane %v274, 4
    %v467 = vrot.slane %v275, 4
    %v468 = vrot.slane %v276, 4
    %v469 = vrot.slane %v277, 4
    %v470 = vrot.slane %v278, 4
    %v471 = vrot.slane %v279, 4
    %v480 = vadd.f32 %v432, %v464
    %v481 = vadd.f32 %v433, %v465
    %v482 = vadd.f32 %v434, %v466
    %v483 = vadd.f32 %v435, %v467
    %v484 = vadd.f32 %v436, %v468
    %v485 = vadd.f32 %v437, %v469
    %v486 = vadd.f32 %v438, %v470
    %v487 = vadd.f32 %v439, %v471
    %v488 = vrot.slane %v151, 5
    %v489 = vrot.slane %v152, 5
    %v490 = vrot.slane %v153, 5
    %v491 = vrot.slane %v154, 5
    %v492 = vrot.slane %v155, 5
    %v493 = vrot.slane %v156, 5
    %v494 = vrot.slane %v157, 5
    %v495 = vrot.slane %v158, 5
    %v504 = vadd.f32 %v456, %v488
    %v505 = vadd.f32 %v457, %v489
    %v506 = vadd.f32 %v458, %v490
    %v507 = vadd.f32 %v459, %v491
    %v508 = vadd.f32 %v460, %v492
    %v509 = vadd.f32 %v461, %v493
    %v510 = vadd.f32 %v462, %v494
    %v511 = vadd.f32 %v463, %v495
    %v512 = vrot.slane %v272, 5
    %v513 = vrot.slane %v273, 5
    %v514 = vrot.slane %v274, 5
    %v515 = vrot.slane %v275, 5
    %v516 = vrot.slane %v276, 5
    %v517 = vrot.slane %v277, 5
    %v518 = vrot.slane %v278, 5
    %v519 = vrot.slane %v279, 5
    %v528 = vadd.f32 %v480, %v512
    %v529 = vadd.f32 %v481, %v513
    %v530 = vadd.f32 %v482, %v514
    %v531 = vadd.f32 %v483, %v515
    %v532 = vadd.f32 %v484, %v516
    %v533 = vadd.f32 %v485, %v517
    %v534 = vadd.f32 %v486, %v518
    %v535 = vadd.f32 %v487, %v519
    %v536 = vrot.slane %v151, 6
    %v537 = vrot.slane %v152, 6
    %v538 = vrot.slane %v153, 6
    %v539 = vrot.slane %v154, 6
    %v540 = vrot.slane %v155, 6
    %v541 = vrot.slane %v156, 6
    %v542 = vrot.slane %v157, 6
    %v543 = vrot.slane %v158, 6
    %v552 = vadd.f32 %v504, %v536
    %v553 = vadd.f32 %v505, %v537
    %v554 = vadd.f32 %v506, %v538
    %v555 = vadd.f32 %v507, %v539
    %v556 = vadd.f32 %v508, %v540
    %v557 = vadd.f32 %v509, %v541
    %v558 = vadd.f32 %v510, %v542
    %v559 = vadd.f32 %v511, %v543
    %v560 = vrot.slane %v272, 6
    %v561 = vrot.slane %v273, 6
    %v562 = vrot.slane %v274, 6
    %v563 = vrot.slane %v275, 6
    %v564 = vrot.slane %v276, 6
    %v565 = vrot.slane %v277, 6
    %v566 = vrot.slane %v278, 6
    %v567 = vrot.slane %v279, 6
    %v576 = vadd.f32 %v528, %v560
    %v577 = vadd.f32 %v529, %v561
    %v578 = vadd.f32 %v530, %v562
    %v579 = vadd.f32 %v531, %v563
    %v580 = vadd.f32 %v532, %v564
    %v581 = vadd.f32 %v533, %v565
    %v582 = vadd.f32 %v534, %v566
    %v583 = vadd.f32 %v535, %v567
    %v584 = vrot.slane %v151, 7
    %v585 = vrot.slane %v152, 7
    %v586 = vrot.slane %v153, 7
    %v587 = vrot.slane %v154, 7
    %v588 = vrot.slane %v155, 7
    %v589 = vrot.slane %v156, 7
    %v590 = vrot.slane %v157, 7
    %v591 = vrot.slane %v158, 7
    %v600 = vadd.f32 %v552, %v584
    %v601 = vadd.f32 %v553, %v585
    %v602 = vadd.f32 %v554, %v586
    %v603 = vadd.f32 %v555, %v587
    %v604 = vadd.f32 %v556, %v588
    %v605 = vadd.f32 %v557, %v589
    %v606 = vadd.f32 %v558, %v590
    %v607 = vadd.f32 %v559, %v591
    %v608 = vrot.slane %v272, 7
    %v609 = vrot.slane %v273, 7
    %v610 = vrot.slane %v274, 7
    %v611 = vrot.slane %v275, 7
    %v612 = vrot.slane %v276, 7
    %v613 = vrot.slane %v277, 7
    %v614 = vrot.slane %v278, 7
    %v615 = vrot.slane %v279, 7
    %v624 = vadd.f32 %v576, %v608
    %v625 = vadd.f32 %v577, %v609
    %v626 = vadd.f32 %v578, %v610
    %v627 = vadd.f32 %v579, %v611
    %v628 = vadd.f32 %v580, %v612
    %v629 = vadd.f32 %v581, %v613
    %v630 = vadd.f32 %v582, %v614
    %v631 = vadd.f32 %v583, %v615
    %v632 = vmul.f32 %v600, 0.125
    %v633 = vmul.f32 %v601, 0.125
    %v634 = vmul.f32 %v602, 0.125
    %v635 = vmul.f32 %v603, 0.125
    %v636 = vmul.f32 %v604, 0.125
    %v637 = vmul.f32 %v605, 0.125
    %v638 = vmul.f32 %v606, 0.125
    %v639 = vmul.f32 %v607, 0.125
    %v640 = vmul.f32 %v624, 0.125
    %v641 = vmul.f32 %v625, 0.125
    %v642 = vmul.f32 %v626, 0.125
    %v643 = vmul.f32 %v627, 0.125
    %v644 = vmul.f32 %v628, 0.125
    %v645 = vmul.f32 %v629, 0.125
    %v646 = vmul.f32 %v630, 0.125
    %v647 = vmul.f32 %v631, 0.125
    %v648 = vsub.f32 %v151, %v632
    %v649 = vsub.f32 %v152, %v633
    %v650 = vsub.f32 %v153, %v634
    %v651 = vsub.f32 %v154, %v635
    %v652 = vsub.f32 %v155, %v636
    %v653 = vsub.f32 %v156, %v637
    %v654 = vsub.f32 %v157, %v638
    %v655 = vsub.f32 %v158, %v639
    %v656 = vmul.f32 %v648, %v648
    %v657 = vmul.f32 %v649, %v649
    %v658 = vmul.f32 %v650, %v650
    %v659 = vmul.f32 %v651, %v651
    %v660 = vmul.f32 %v652, %v652
    %v661 = vmul.f32 %v653, %v653
    %v662 = vmul.f32 %v654, %v654
    %v663 = vmul.f32 %v655, %v655
    %v672 = vrot.slane %v632, 7
    %v673 = vrot.slane %v633, 7
    %v674 = vrot.slane %v634, 7
    %v675 = vrot.slane %v635, 7
    %v676 = vrot.slane %v636, 7
    %v677 = vrot.slane %v637, 7
    %v678 = vrot.slane %v638, 7
    %v679 = vrot.slane %v639, 7
    %v688 = vsub.f32 %v151, %v672
    %v689 = vsub.f32 %v152, %v673
    %v690 = vsub.f32 %v153, %v674
    %v691 = vsub.f32 %v154, %v675
    %v692 = vsub.f32 %v155, %v676
    %v693 = vsub.f32 %v156, %v677
    %v694 = vsub.f32 %v157, %v678
    %v695 = vsub.f32 %v158, %v679
    %v696 = vmul.f32 %v688, %v688
    %v697 = vmul.f32 %v689, %v689
    %v698 = vmul.f32 %v690, %v690
    %v699 = vmul.f32 %v691, %v691
    %v700 = vmul.f32 %v692, %v692
    %v701 = vmul.f32 %v693, %v693
    %v702 = vmul.f32 %v694, %v694
    %v703 = vmul.f32 %v695, %v695
    %v712 = vrot.slane %v696, 1
    %v713 = vrot.slane %v697, 1
    %v714 = vrot.slane %v698, 1
    %v715 = vrot.slane %v699, 1
    %v716 = vrot.slane %v700, 1
    %v717 = vrot.slane %v701, 1
    %v718 = vrot.slane %v702, 1
    %v719 = vrot.slane %v703, 1
    %v728 = vadd.f32 %v656, %v712
    %v729 = vadd.f32 %v657, %v713
    %v730 = vadd.f32 %v658, %v714
    %v731 = vadd.f32 %v659, %v715
    %v732 = vadd.f32 %v660, %v716
    %v733 = vadd.f32 %v661, %v717
    %v734 = vadd.f32 %v662, %v718
    %v735 = vadd.f32 %v663, %v719
    %v736 = vrot.slane %v632, 6
    %v737 = vrot.slane %v633, 6
    %v738 = vrot.slane %v634, 6
    %v739 = vrot.slane %v635, 6
    %v740 = vrot.slane %v636, 6
    %v741 = vrot.slane %v637, 6
    %v742 = vrot.slane %v638, 6
    %v743 = vrot.slane %v639, 6
    %v752 = vsub.f32 %v151, %v736
    %v753 = vsub.f32 %v152, %v737
    %v754 = vsub.f32 %v153, %v738
    %v755 = vsub.f32 %v154, %v739
    %v756 = vsub.f32 %v155, %v740
    %v757 = vsub.f32 %v156, %v741
    %v758 = vsub.f32 %v157, %v742
    %v759 = vsub.f32 %v158, %v743
    %v760 = vmul.f32 %v752, %v752
    %v761 = vmul.f32 %v753, %v753
    %v762 = vmul.f32 %v754, %v754
    %v763 = vmul.f32 %v755, %v755
    %v764 = vmul.f32 %v756, %v756
    %v765 = vmul.f32 %v757, %v757
    %v766 = vmul.f32 %v758, %v758
    %v767 = vmul.f32 %v759, %v759
    %v776 = vrot.slane %v760, 2
    %v777 = vrot.slane %v761, 2
    %v778 = vrot.slane %v762, 2
    %v779 = vrot.slane %v763, 2
    %v780 = vrot.slane %v764, 2
    %v781 = vrot.slane %v765, 2
    %v782 = vrot.slane %v766, 2
    %v783 = vrot.slane %v767, 2
    %v792 = vadd.f32 %v728, %v776
    %v793 = vadd.f32 %v729, %v777
    %v794 = vadd.f32 %v730, %v778
    %v795 = vadd.f32 %v731, %v779
    %v796 = vadd.f32 %v732, %v780
    %v797 = vadd.f32 %v733, %v781
    %v798 = vadd.f32 %v734, %v782
    %v799 = vadd.f32 %v735, %v783
    %v800 = vrot.slane %v632, 5
    %v801 = vrot.slane %v633, 5
    %v802 = vrot.slane %v634, 5
    %v803 = vrot.slane %v635, 5
    %v804 = vrot.slane %v636, 5
    %v805 = vrot.slane %v637, 5
    %v806 = vrot.slane %v638, 5
    %v807 = vrot.slane %v639, 5
    %v816 = vsub.f32 %v151, %v800
    %v817 = vsub.f32 %v152, %v801
    %v818 = vsub.f32 %v153, %v802
    %v819 = vsub.f32 %v154, %v803
    %v820 = vsub.f32 %v155, %v804
    %v821 = vsub.f32 %v156, %v805
    %v822 = vsub.f32 %v157, %v806
    %v823 = vsub.f32 %v158, %v807
    %v824 = vmul.f32 %v816, %v816
    %v825 = vmul.f32 %v817, %v817
    %v826 = vmul.f32 %v818, %v818
    %v827 = vmul.f32 %v819, %v819
    %v828 = vmul.f32 %v820, %v820
    %v829 = vmul.f32 %v821, %v821
    %v830 = vmul.f32 %v822, %v822
    %v831 = vmul.f32 %v823, %v823
    %v840 = vrot.slane %v824, 3
    %v841 = vrot.slane %v825, 3
    %v842 = vrot.slane %v826, 3
    %v843 = vrot.slane %v827, 3
    %v844 = vrot.slane %v828, 3
    %v845 = vrot.slane %v829, 3
    %v846 = vrot.slane %v830, 3
    %v847 = vrot.slane %v831, 3
    %v856 = vadd.f32 %v792, %v840
    %v857 = vadd.f32 %v793, %v841
    %v858 = vadd.f32 %v794, %v842
    %v859 = vadd.f32 %v795, %v843
    %v860 = vadd.f32 %v796, %v844
    %v861 = vadd.f32 %v797, %v845
    %v862 = vadd.f32 %v798, %v846
    %v863 = vadd.f32 %v799, %v847
    %v864 = vrot.slane %v632, 4
    %v865 = vrot.slane %v633, 4
    %v866 = vrot.slane %v634, 4
    %v867 = vrot.slane %v635, 4
    %v868 = vrot.slane %v636, 4
    %v869 = vrot.slane %v637, 4
    %v870 = vrot.slane %v638, 4
    %v871 = vrot.slane %v639, 4
    %v880 = vsub.f32 %v151, %v864
    %v881 = vsub.f32 %v152, %v865
    %v882 = vsub.f32 %v153, %v866
    %v883 = vsub.f32 %v154, %v867
    %v884 = vsub.f32 %v155, %v868
    %v885 = vsub.f32 %v156, %v869
    %v886 = vsub.f32 %v157, %v870
    %v887 = vsub.f32 %v158, %v871
    %v888 = vmul.f32 %v880, %v880
    %v889 = vmul.f32 %v881, %v881
    %v890 = vmul.f32 %v882, %v882
    %v891 = vmul.f32 %v883, %v883
    %v892 = vmul.f32 %v884, %v884
    %v893 = vmul.f32 %v885, %v885
    %v894 = vmul.f32 %v886, %v886
    %v895 = vmul.f32 %v887, %v887
    %v904 = vrot.slane %v888, 4
    %v905 = vrot.slane %v889, 4
    %v906 = vrot.slane %v890, 4
    %v907 = vrot.slane %v891, 4
    %v908 = vrot.slane %v892, 4
    %v909 = vrot.slane %v893, 4
    %v910 = vrot.slane %v894, 4
    %v911 = vrot.slane %v895, 4
    %v920 = vadd.f32 %v856, %v904
    %v921 = vadd.f32 %v857, %v905
    %v922 = vadd.f32 %v858, %v906
    %v923 = vadd.f32 %v859, %v907
    %v924 = vadd.f32 %v860, %v908
    %v925 = vadd.f32 %v861, %v909
    %v926 = vadd.f32 %v862, %v910
    %v927 = vadd.f32 %v863, %v911
    %v928 = vrot.slane %v632, 3
    %v929 = vrot.slane %v633, 3
    %v930 = vrot.slane %v634, 3
    %v931 = vrot.slane %v635, 3
    %v932 = vrot.slane %v636, 3
    %v933 = vrot.slane %v637, 3
    %v934 = vrot.slane %v638, 3
    %v935 = vrot.slane %v639, 3
    %v944 = vsub.f32 %v151, %v928
    %v945 = vsub.f32 %v152, %v929
    %v946 = vsub.f32 %v153, %v930
    %v947 = vsub.f32 %v154, %v931
    %v948 = vsub.f32 %v155, %v932
    %v949 = vsub.f32 %v156, %v933
    %v950 = vsub.f32 %v157, %v934
    %v951 = vsub.f32 %v158, %v935
    %v952 = vmul.f32 %v944, %v944
    %v953 = vmul.f32 %v945, %v945
    %v954 = vmul.f32 %v946, %v946
    %v955 = vmul.f32 %v947, %v947
    %v956 = vmul.f32 %v948, %v948
    %v957 = vmul.f32 %v949, %v949
    %v958 = vmul.f32 %v950, %v950
    %v959 = vmul.f32 %v951, %v951
    %v968 = vrot.slane %v952, 5
    %v969 = vrot.slane %v953, 5
    %v970 = vrot.slane %v954, 5
    %v971 = vrot.slane %v955, 5
    %v972 = vrot.slane %v956, 5
    %v973 = vrot.slane %v957, 5
    %v974 = vrot.slane %v958, 5
    %v975 = vrot.slane %v959, 5
    %v984 = vadd.f32 %v920, %v968
    %v985 = vadd.f32 %v921, %v969
    %v986 = vadd.f32 %v922, %v970
    %v987 = vadd.f32 %v923, %v971
    %v988 = vadd.f32 %v924, %v972
    %v989 = vadd.f32 %v925, %v973
    %v990 = vadd.f32 %v926, %v974
    %v991 = vadd.f32 %v927, %v975
    %v992 = vrot.slane %v632, 2
    %v993 = vrot.slane %v633, 2
    %v994 = vrot.slane %v634, 2
    %v995 = vrot.slane %v635, 2
    %v996 = vrot.slane %v636, 2
    %v997 = vrot.slane %v637, 2
    %v998 = vrot.slane %v638, 2
    %v999 = vrot.slane %v639, 2
    %v1008 = vsub.f32 %v151, %v992
    %v1009 = vsub.f32 %v152, %v993
    %v1010 = vsub.f32 %v153, %v994
    %v1011 = vsub.f32 %v154, %v995
    %v1012 = vsub.f32 %v155, %v996
    %v1013 = vsub.f32 %v156, %v997
    %v1014 = vsub.f32 %v157, %v998
    %v1015 = vsub.f32 %v158, %v999
    %v1016 = vmul.f32 %v1008, %v1008
    %v1017 = vmul.f32 %v1009, %v1009
    %v1018 = vmul.f32 %v1010, %v1010
    %v1019 = vmul.f32 %v1011, %v1011
    %v1020 = vmul.f32 %v1012, %v1012
    %v1021 = vmul.f32 %v1013, %v1013
    %v1022 = vmul.f32 %v1014, %v1014
    %v1023 = vmul.f32 %v1015, %v1015
    %v1032 = vrot.slane %v1016, 6
    %v1033 = vrot.slane %v1017, 6
    %v1034 = vrot.slane %v1018, 6
    %v1035 = vrot.slane %v1019, 6
    %v1036 = vrot.slane %v1020, 6
    %v1037 = vrot.slane %v1021, 6
    %v1038 = vrot.slane %v1022, 6
    %v1039 = vrot.slane %v1023, 6
    %v1048 = vadd.f32 %v984, %v1032
    %v1049 = vadd.f32 %v985, %v1033
    %v1050 = vadd.f32 %v986, %v1034
    %v1051 = vadd.f32 %v987, %v1035
    %v1052 = vadd.f32 %v988, %v1036
    %v1053 = vadd.f32 %v989, %v1037
    %v1054 = vadd.f32 %v990, %v1038
    %v1055 = vadd.f32 %v991, %v1039
    %v1056 = vrot.slane %v632, 1
    %v1057 = vrot.slane %v633, 1
    %v1058 = vrot.slane %v634, 1
    %v1059 = vrot.slane %v635, 1
    %v1060 = vrot.slane %v636, 1
    %v1061 = vrot.slane %v637, 1
    %v1062 = vrot.slane %v638, 1
    %v1063 = vrot.slane %v639, 1
    %v1072 = vsub.f32 %v151, %v1056
    %v1073 = vsub.f32 %v152, %v1057
    %v1074 = vsub.f32 %v153, %v1058
    %v1075 = vsub.f32 %v154, %v1059
    %v1076 = vsub.f32 %v155, %v1060
    %v1077 = vsub.f32 %v156, %v1061
    %v1078 = vsub.f32 %v157, %v1062
    %v1079 = vsub.f32 %v158, %v1063
    %v1080 = vmul.f32 %v1072, %v1072
    %v1081 = vmul.f32 %v1073, %v1073
    %v1082 = vmul.f32 %v1074, %v1074
    %v1083 = vmul.f32 %v1075, %v1075
    %v1084 = vmul.f32 %v1076, %v1076
    %v1085 = vmul.f32 %v1077, %v1077
    %v1086 = vmul.f32 %v1078, %v1078
    %v1087 = vmul.f32 %v1079, %v1079
    %v1096 = vrot.slane %v1080, 7
    %v1097 = vrot.slane %v1081, 7
    %v1098 = vrot.slane %v1082, 7
    %v1099 = vrot.slane %v1083, 7
    %v1100 = vrot.slane %v1084, 7
    %v1101 = vrot.slane %v1085, 7
    %v1102 = vrot.slane %v1086, 7
    %v1103 = vrot.slane %v1087, 7
    %v1112 = vadd.f32 %v1048, %v1096
    %v1113 = vadd.f32 %v1049, %v1097
    %v1114 = vadd.f32 %v1050, %v1098
    %v1115 = vadd.f32 %v1051, %v1099
    %v1116 = vadd.f32 %v1052, %v1100
    %v1117 = vadd.f32 %v1053, %v1101
    %v1118 = vadd.f32 %v1054, %v1102
    %v1119 = vadd.f32 %v1055, %v1103
    %v1120 = vmul.f32 %v1112, 0.125
    %v1121 = vmul.f32 %v1113, 0.125
    %v1122 = vmul.f32 %v1114, 0.125
    %v1123 = vmul.f32 %v1115, 0.125
    %v1124 = vmul.f32 %v1116, 0.125
    %v1125 = vmul.f32 %v1117, 0.125
    %v1126 = vmul.f32 %v1118, 0.125
    %v1127 = vmul.f32 %v1119, 0.125
    %v1128 = vsub.f32 %v166, %v222
    %v1129 = vsub.f32 %v173, %v229
    %v1130 = vsub.f32 %v180, %v236
    %v1131 = vsub.f32 %v187, %v243
    %v1132 = vsub.f32 %v194, %v250
    %v1133 = vsub.f32 %v201, %v257
    %v1134 = vsub.f32 %v208, %v264
    %v1135 = vsub.f32 %v215, %v271
    %v1136 = vrsqrt.pop %v1120
    %v1137 = vmul.f32 %v1120, %v1136
    %vm1138 = vcmp.eq.f32.partialorder %v1120, inf
    %v1139 = vsel %vm1138, %v1120, %v1137
    %vm1140 = vcmp.eq.f32.partialorder %v1120, 0.0
    %v1141 = vand.u32 %v1120, 2147483648
    %v1142 = vsel %vm1140, %v1141, %v1139
    %v1143 = vrsqrt.pop %v1121
    %v1144 = vmul.f32 %v1121, %v1143
    %vm1145 = vcmp.eq.f32.partialorder %v1121, inf
    %v1146 = vsel %vm1145, %v1121, %v1144
    %vm1147 = vcmp.eq.f32.partialorder %v1121, 0.0
    %v1148 = vand.u32 %v1121, 2147483648
    %v1149 = vsel %vm1147, %v1148, %v1146
    %v1150 = vrsqrt.pop %v1122
    %v1151 = vmul.f32 %v1122, %v1150
    %vm1152 = vcmp.eq.f32.partialorder %v1122, inf
    %v1153 = vsel %vm1152, %v1122, %v1151
    %vm1154 = vcmp.eq.f32.partialorder %v1122, 0.0
    %v1155 = vand.u32 %v1122, 2147483648
    %v1156 = vsel %vm1154, %v1155, %v1153
    %v1157 = vrsqrt.pop %v1123
    %v1158 = vmul.f32 %v1123, %v1157
    %vm1159 = vcmp.eq.f32.partialorder %v1123, inf
    %v1160 = vsel %vm1159, %v1123, %v1158
    %vm1161 = vcmp.eq.f32.partialorder %v1123, 0.0
    %v1162 = vand.u32 %v1123, 2147483648
    %v1163 = vsel %vm1161, %v1162, %v1160
    %v1164 = vrsqrt.pop %v1124
    %v1165 = vmul.f32 %v1124, %v1164
    %vm1166 = vcmp.eq.f32.partialorder %v1124, inf
    %v1167 = vsel %vm1166, %v1124, %v1165
    %vm1168 = vcmp.eq.f32.partialorder %v1124, 0.0
    %v1169 = vand.u32 %v1124, 2147483648
    %v1170 = vsel %vm1168, %v1169, %v1167
    %v1171 = vrsqrt.pop %v1125
    %v1172 = vmul.f32 %v1125, %v1171
    %vm1173 = vcmp.eq.f32.partialorder %v1125, inf
    %v1174 = vsel %vm1173, %v1125, %v1172
    %vm1175 = vcmp.eq.f32.partialorder %v1125, 0.0
    %v1176 = vand.u32 %v1125, 2147483648
    %v1177 = vsel %vm1175, %v1176, %v1174
    %v1178 = vrsqrt.pop %v1126
    %v1179 = vmul.f32 %v1126, %v1178
    %vm1180 = vcmp.eq.f32.partialorder %v1126, inf
    %v1181 = vsel %vm1180, %v1126, %v1179
    %vm1182 = vcmp.eq.f32.partialorder %v1126, 0.0
    %v1183 = vand.u32 %v1126, 2147483648
    %v1184 = vsel %vm1182, %v1183, %v1181
    %v1185 = vrsqrt.pop %v1127
    %v1186 = vmul.f32 %v1127, %v1185
    %vm1187 = vcmp.eq.f32.partialorder %v1127, inf
    %v1188 = vsel %vm1187, %v1127, %v1186
    %vm1189 = vcmp.eq.f32.partialorder %v1127, 0.0
    %v1190 = vand.u32 %v1127, 2147483648
    %v1191 = vsel %vm1189, %v1190, %v1188
    %v1192 = vrsqrt.pop %v640
    %v1193 = vmul.f32 %v640, %v1192
    %vm1194 = vcmp.eq.f32.partialorder %v640, inf
    %v1195 = vsel %vm1194, %v640, %v1193
    %vm1196 = vcmp.eq.f32.partialorder %v640, 0.0
    %v1197 = vand.u32 %v640, 2147483648
    %v1198 = vsel %vm1196, %v1197, %v1195
    %v1199 = vrsqrt.pop %v641
    %v1200 = vmul.f32 %v641, %v1199
    %vm1201 = vcmp.eq.f32.partialorder %v641, inf
    %v1202 = vsel %vm1201, %v641, %v1200
    %vm1203 = vcmp.eq.f32.partialorder %v641, 0.0
    %v1204 = vand.u32 %v641, 2147483648
    %v1205 = vsel %vm1203, %v1204, %v1202
    %v1206 = vrsqrt.pop %v642
    %v1207 = vmul.f32 %v642, %v1206
    %vm1208 = vcmp.eq.f32.partialorder %v642, inf
    %v1209 = vsel %vm1208, %v642, %v1207
    %vm1210 = vcmp.eq.f32.partialorder %v642, 0.0
    %v1211 = vand.u32 %v642, 2147483648
    %v1212 = vsel %vm1210, %v1211, %v1209
    %v1213 = vrsqrt.pop %v643
    %v1214 = vmul.f32 %v643, %v1213
    %vm1215 = vcmp.eq.f32.partialorder %v643, inf
    %v1216 = vsel %vm1215, %v643, %v1214
    %vm1217 = vcmp.eq.f32.partialorder %v643, 0.0
    %v1218 = vand.u32 %v643, 2147483648
    %v1219 = vsel %vm1217, %v1218, %v1216
    %v1220 = vrsqrt.pop %v644
    %v1221 = vmul.f32 %v644, %v1220
    %vm1222 = vcmp.eq.f32.partialorder %v644, inf
    %v1223 = vsel %vm1222, %v644, %v1221
    %vm1224 = vcmp.eq.f32.partialorder %v644, 0.0
    %v1225 = vand.u32 %v644, 2147483648
    %v1226 = vsel %vm1224, %v1225, %v1223
    %v1227 = vrsqrt.pop %v645
    %v1228 = vmul.f32 %v645, %v1227
    %vm1229 = vcmp.eq.f32.partialorder %v645, inf
    %v1230 = vsel %vm1229, %v645, %v1228
    %vm1231 = vcmp.eq.f32.partialorder %v645, 0.0
    %v1232 = vand.u32 %v645, 2147483648
    %v1233 = vsel %vm1231, %v1232, %v1230
    %v1234 = vrsqrt.pop %v646
    %v1235 = vmul.f32 %v646, %v1234
    %vm1236 = vcmp.eq.f32.partialorder %v646, inf
    %v1237 = vsel %vm1236, %v646, %v1235
    %vm1238 = vcmp.eq.f32.partialorder %v646, 0.0
    %v1239 = vand.u32 %v646, 2147483648
    %v1240 = vsel %vm1238, %v1239, %v1237
    %v1241 = vrsqrt.pop %v647
    %v1242 = vmul.f32 %v647, %v1241
    %vm1243 = vcmp.eq.f32.partialorder %v647, inf
    %v1244 = vsel %vm1243, %v647, %v1242
    %vm1245 = vcmp.eq.f32.partialorder %v647, 0.0
    %v1246 = vand.u32 %v647, 2147483648
    %v1247 = vsel %vm1245, %v1246, %v1244
    %v1248 = vand.u32 2147483647, %v632
    %v1249 = vand.u32 2147483647, %v633
    %v1250 = vand.u32 2147483647, %v634
    %v1251 = vand.u32 2147483647, %v635
    %v1252 = vand.u32 2147483647, %v636
    %v1253 = vand.u32 2147483647, %v637
    %v1254 = vand.u32 2147483647, %v638
    %v1255 = vand.u32 2147483647, %v639
    %v1256 = vand.u32 2147483647, %v1128
    %v1257 = vand.u32 2147483647, %v1129
    %v1258 = vand.u32 2147483647, %v1130
    %v1259 = vand.u32 2147483647, %v1131
    %v1260 = vand.u32 2147483647, %v1132
    %v1261 = vand.u32 2147483647, %v1133
    %v1262 = vand.u32 2147483647, %v1134
    %v1263 = vand.u32 2147483647, %v1135
    %v1264 = vand.u32 2147483647, %v1142
    %v1265 = vand.u32 2147483647, %v1149
    %v1266 = vand.u32 2147483647, %v1156
    %v1267 = vand.u32 2147483647, %v1163
    %v1268 = vand.u32 2147483647, %v1170
    %v1269 = vand.u32 2147483647, %v1177
    %v1270 = vand.u32 2147483647, %v1184
    %v1271 = vand.u32 2147483647, %v1191
    %v1272 = vand.u32 2147483647, %v1198
    %v1273 = vand.u32 2147483647, %v1205
    %v1274 = vand.u32 2147483647, %v1212
    %v1275 = vand.u32 2147483647, %v1219
    %v1276 = vand.u32 2147483647, %v1226
    %v1277 = vand.u32 2147483647, %v1233
    %v1278 = vand.u32 2147483647, %v1240
    %v1279 = vand.u32 2147483647, %v1247
    %v1280 = vld [vmem:[#allocation5] sm:$0xff]
    %v1281 = vld [vmem:[#allocation5 + $0x8] sm:$0xff]
    %v1282 = vld [vmem:[#allocation5 + $0x10] sm:$0xff]
    %v1283 = vld [vmem:[#allocation5 + $0x18] sm:$0xff]
    %v1284 = vld [vmem:[%s2] sm:$0x1]
    %v1286 = vlaneseq
    %v1287 = vshrl.u32 %v1286, 7
    %v1288 = vsub.s32 0, %v1287
    %v1289 = vrot.slane %v1284, %v1288
    %v1299 = vrot.slane %v1249, 7
    %vm1300 = vcmask 1041409
    %v1301 = vsel %vm1300, %v1299, %v1248
    %v1302 = vrot.slane %v1250, 6
    %vm1303 = vcmask 1042434
    %v1304 = vsel %vm1303, %v1302, %v1301
    %v1305 = vrot.slane %v1251, 5
    %vm1306 = vcmask 1043459
    %v1307 = vsel %vm1306, %v1305, %v1304
    %v1308 = vrot.slane %v1252, 4
    %vm1309 = vcmask 1044484
    %v1310 = vsel %vm1309, %v1308, %v1307
    %v1311 = vrot.slane %v1253, 3
    %vm1312 = vcmask 1045509
    %v1313 = vsel %vm1312, %v1311, %v1310
    %v1314 = vrot.slane %v1254, 2
    %vm1315 = vcmask 1046534
    %v1316 = vsel %vm1315, %v1314, %v1313
    %v1317 = vrot.slane %v1255, 1
    %vm1318 = vcmask 1047559
    %v1319 = vsel %vm1318, %v1317, %v1316
    %v1320 = vsel %vm159, %v1319, 0
    %1322 = vmatprep.subr.mxu0 0.0
    %1323 = vmatpush1.msra.mxu0 %v1280
    %1324 = vmatprep.subr.mxu0 0.0
    %1325 = vmatpush1.msra.mxu0 %v1281
    %1326 = vmatprep.subr.mxu0 0.0
    %1327 = vmatpush1.msra.mxu0 %v1282
    %1328 = vmatprep.subr.mxu0 0.0
    %1329 = vmatpush1.msra.mxu0 %v1283
    %1330 = vmatprep.subr.mxu0 0.0
    %1331 = vmatpush1.msra.mxu0 0.0
    %1332 = vmatprep.subr.mxu0 0.0
    %1333 = vmatpush1.msra.mxu0 0.0
    %1334 = vmatprep.subr.mxu0 0.0
    %1335 = vmatpush1.msra.mxu0 0.0
    %1336 = vmatprep.subr.mxu0 0.0
    %1337 = vmatpush1.msra.mxu0 0.0
    %1338 = vmatprep.subr.mxu0 0.0
    %1339 = vmatpush1.msra.mxu0 0.0
    %1340 = vmatprep.subr.mxu0 0.0
    %1341 = vmatpush1.msra.mxu0 0.0
    %1342 = vmatprep.subr.mxu0 0.0
    %1343 = vmatpush1.msra.mxu0 0.0
    %1344 = vmatprep.subr.mxu0 0.0
    %1345 = vmatpush1.msra.mxu0 0.0
    %1346 = vmatprep.subr.mxu0 0.0
    %1347 = vmatpush1.msra.mxu0 0.0
    %1348 = vmatprep.subr.mxu0 0.0
    %1349 = vmatpush1.msra.mxu0 0.0
    %1350 = vmatprep.subr.mxu0 0.0
    %1351 = vmatpush1.msra.mxu0 0.0
    %1352 = vmatprep.subr.mxu0 0.0
    %1353 = vmatpush1.msra.mxu0 0.0
    %1354 = vmatprep.subr.mxu0 0.0
    %1355 = vmatpush1.msra.mxu0 0.0
    %1356 = vmatprep.subr.mxu0 0.0
    %1357 = vmatpush1.msra.mxu0 0.0
    %1358 = vmatprep.subr.mxu0 0.0
    %1359 = vmatpush1.msra.mxu0 0.0
    %1360 = vmatprep.subr.mxu0 0.0
    %1361 = vmatpush1.msra.mxu0 0.0
    %1362 = vmatprep.subr.mxu0 0.0
    %1363 = vmatpush1.msra.mxu0 0.0
    %1364 = vmatprep.subr.mxu0 0.0
    %1365 = vmatpush1.msra.mxu0 0.0
    %1366 = vmatprep.subr.mxu0 0.0
    %1367 = vmatpush1.msra.mxu0 0.0
    %1368 = vmatprep.subr.mxu0 0.0
    %1369 = vmatpush1.msra.mxu0 0.0
    %1370 = vmatprep.subr.mxu0 0.0
    %1371 = vmatpush1.msra.mxu0 0.0
    %1372 = vmatprep.subr.mxu0 0.0
    %1373 = vmatpush1.msra.mxu0 0.0
    %1374 = vmatprep.subr.mxu0 0.0
    %1375 = vmatpush1.msra.mxu0 0.0
    %1376 = vmatprep.subr.mxu0 0.0
    %1377 = vmatpush1.msra.mxu0 0.0
    %1378 = vmatprep.subr.mxu0 0.0
    %1379 = vmatpush1.msra.mxu0 0.0
    %1380 = vmatprep.subr.mxu0 0.0
    %1381 = vmatpush1.msra.mxu0 0.0
    %1382 = vmatprep.subr.mxu0 0.0
    %1383 = vmatpush1.msra.mxu0 0.0
    %1384 = vmatprep.subr.mxu0 0.0
    %1385 = vmatpush1.msra.mxu0 0.0
    %1386 = vmatprep.mubr.f32.mxu0 0.0
    %1387 = vmatmul.mubr.f32.gmra.mrb[0].mxu0 %v1320
    %v1388 = vpop.f32.mrb[0].mxu0
    %v1389 = vadd.f32 %v1289, %v1388
    %v1390 = vpop.f32.mrb[0].mxu0
    %1391 = vdwg.mxu0
    %v1392 = vmax.f32 %v1389, 0.0
    %v1393 = vld [vmem:[#allocation7] sm:$0xff]
    %v1394 = vld [vmem:[#allocation7 + $0x8] sm:$0xff]
    %v1395 = vld [vmem:[#allocation7 + $0x10] sm:$0xff]
    %v1396 = vld [vmem:[#allocation7 + $0x18] sm:$0xff]
    %v1397 = vld [vmem:[#allocation7 + $0x20] sm:$0xff]
    %v1398 = vld [vmem:[#allocation7 + $0x28] sm:$0xff]
    %v1399 = vld [vmem:[#allocation7 + $0x30] sm:$0xff]
    %v1400 = vld [vmem:[#allocation7 + $0x38] sm:$0xff]
    %v1409 = vsel %vm1300, %v1257, %v1256
    %v1410 = vsel %vm1303, %v1258, %v1409
    %v1411 = vsel %vm1306, %v1259, %v1410
    %v1412 = vsel %vm1309, %v1260, %v1411
    %v1413 = vsel %vm1312, %v1261, %v1412
    %v1414 = vsel %vm1315, %v1262, %v1413
    %v1415 = vsel %vm1318, %v1263, %v1414
    %v1416 = vsel %vm159, %v1415, 0
    %1418 = vmatprep.subr.mxu0 0.0
    %1419 = vmatpush1.msra.mxu0 %v1280
    %1420 = vmatprep.subr.mxu0 0.0
    %1421 = vmatpush1.msra.mxu0 %v1281
    %1422 = vmatprep.subr.mxu0 0.0
    %1423 = vmatpush1.msra.mxu0 %v1282
    %1424 = vmatprep.subr.mxu0 0.0
    %1425 = vmatpush1.msra.mxu0 %v1283
    %1426 = vmatprep.subr.mxu0 0.0
    %1427 = vmatpush1.msra.mxu0 0.0
    %1428 = vmatprep.subr.mxu0 0.0
    %1429 = vmatpush1.msra.mxu0 0.0
    %1430 = vmatprep.subr.mxu0 0.0
    %1431 = vmatpush1.msra.mxu0 0.0
    %1432 = vmatprep.subr.mxu0 0.0
    %1433 = vmatpush1.msra.mxu0 0.0
    %1434 = vmatprep.subr.mxu0 0.0
    %1435 = vmatpush1.msra.mxu0 0.0
    %1436 = vmatprep.subr.mxu0 0.0
    %1437 = vmatpush1.msra.mxu0 0.0
    %1438 = vmatprep.subr.mxu0 0.0
    %1439 = vmatpush1.msra.mxu0 0.0
    %1440 = vmatprep.subr.mxu0 0.0
    %1441 = vmatpush1.msra.mxu0 0.0
    %1442 = vmatprep.subr.mxu0 0.0
    %1443 = vmatpush1.msra.mxu0 0.0
    %1444 = vmatprep.subr.mxu0 0.0
    %1445 = vmatpush1.msra.mxu0 0.0
    %1446 = vmatprep.subr.mxu0 0.0
    %1447 = vmatpush1.msra.mxu0 0.0
    %1448 = vmatprep.subr.mxu0 0.0
    %1449 = vmatpush1.msra.mxu0 0.0
    %1450 = vmatprep.subr.mxu0 0.0
    %1451 = vmatpush1.msra.mxu0 0.0
    %1452 = vmatprep.subr.mxu0 0.0
    %1453 = vmatpush1.msra.mxu0 0.0
    %1454 = vmatprep.subr.mxu0 0.0
    %1455 = vmatpush1.msra.mxu0 0.0
    %1456 = vmatprep.subr.mxu0 0.0
    %1457 = vmatpush1.msra.mxu0 0.0
    %1458 = vmatprep.subr.mxu0 0.0
    %1459 = vmatpush1.msra.mxu0 0.0
    %1460 = vmatprep.subr.mxu0 0.0
    %1461 = vmatpush1.msra.mxu0 0.0
    %1462 = vmatprep.subr.mxu0 0.0
    %1463 = vmatpush1.msra.mxu0 0.0
    %1464 = vmatprep.subr.mxu0 0.0
    %1465 = vmatpush1.msra.mxu0 0.0
    %1466 = vmatprep.subr.mxu0 0.0
    %1467 = vmatpush1.msra.mxu0 0.0
    %1468 = vmatprep.subr.mxu0 0.0
    %1469 = vmatpush1.msra.mxu0 0.0
    %1470 = vmatprep.subr.mxu0 0.0
    %1471 = vmatpush1.msra.mxu0 0.0
    %1472 = vmatprep.subr.mxu0 0.0
    %1473 = vmatpush1.msra.mxu0 0.0
    %1474 = vmatprep.subr.mxu0 0.0
    %1475 = vmatpush1.msra.mxu0 0.0
    %1476 = vmatprep.subr.mxu0 0.0
    %1477 = vmatpush1.msra.mxu0 0.0
    %1478 = vmatprep.subr.mxu0 0.0
    %1479 = vmatpush1.msra.mxu0 0.0
    %1480 = vmatprep.subr.mxu0 0.0
    %1481 = vmatpush1.msra.mxu0 0.0
    %1482 = vmatprep.mubr.f32.mxu0 0.0
    %1483 = vmatmul.mubr.f32.gmra.mrb[0].mxu0 %v1416
    %v1484 = vpop.f32.mrb[0].mxu0
    %v1485 = vadd.f32 %v1289, %v1484
    %v1486 = vpop.f32.mrb[0].mxu0
    %1487 = vdwg.mxu0
    %v1488 = vmax.f32 %v1485, 0.0
    %v1489 = vld [vmem:[#allocation8] sm:$0xff]
    %v1490 = vld [vmem:[#allocation8 + $0x8] sm:$0xff]
    %v1491 = vld [vmem:[#allocation8 + $0x10] sm:$0xff]
    %v1492 = vld [vmem:[#allocation8 + $0x18] sm:$0xff]
    %v1493 = vld [vmem:[#allocation8 + $0x20] sm:$0xff]
    %v1494 = vld [vmem:[#allocation8 + $0x28] sm:$0xff]
    %v1495 = vld [vmem:[#allocation8 + $0x30] sm:$0xff]
    %v1496 = vld [vmem:[#allocation8 + $0x38] sm:$0xff]
    %vm1497 = vcmask 523264
    %v1499 = vsel %vm1497, %v1488, 0
    %1501 = vmatprep.subr.mxu0 0.0
    %1502 = vmatpush1.msra.mxu0 %v1489
    %1503 = vmatprep.subr.mxu0 0.0
    %1504 = vmatpush1.msra.mxu0 %v1490
    %1505 = vmatprep.subr.mxu0 0.0
    %1506 = vmatpush1.msra.mxu0 %v1491
    %1507 = vmatprep.subr.mxu0 0.0
    %1508 = vmatpush1.msra.mxu0 %v1492
    %1509 = vmatprep.subr.mxu0 0.0
    %1510 = vmatpush1.msra.mxu0 %v1493
    %1511 = vmatprep.subr.mxu0 0.0
    %1512 = vmatpush1.msra.mxu0 %v1494
    %1513 = vmatprep.subr.mxu0 0.0
    %1514 = vmatpush1.msra.mxu0 %v1495
    %1515 = vmatprep.subr.mxu0 0.0
    %1516 = vmatpush1.msra.mxu0 %v1496
    %1517 = vmatprep.subr.mxu0 0.0
    %1518 = vmatpush1.msra.mxu0 0.0
    %1519 = vmatprep.subr.mxu0 0.0
    %1520 = vmatpush1.msra.mxu0 0.0
    %1521 = vmatprep.subr.mxu0 0.0
    %1522 = vmatpush1.msra.mxu0 0.0
    %1523 = vmatprep.subr.mxu0 0.0
    %1524 = vmatpush1.msra.mxu0 0.0
    %1525 = vmatprep.subr.mxu0 0.0
    %1526 = vmatpush1.msra.mxu0 0.0
    %1527 = vmatprep.subr.mxu0 0.0
    %1528 = vmatpush1.msra.mxu0 0.0
    %1529 = vmatprep.subr.mxu0 0.0
    %1530 = vmatpush1.msra.mxu0 0.0
    %1531 = vmatprep.subr.mxu0 0.0
    %1532 = vmatpush1.msra.mxu0 0.0
    %1533 = vmatprep.subr.mxu0 0.0
    %1534 = vmatpush1.msra.mxu0 0.0
    %1535 = vmatprep.subr.mxu0 0.0
    %1536 = vmatpush1.msra.mxu0 0.0
    %1537 = vmatprep.subr.mxu0 0.0
    %1538 = vmatpush1.msra.mxu0 0.0
    %1539 = vmatprep.subr.mxu0 0.0
    %1540 = vmatpush1.msra.mxu0 0.0
    %1541 = vmatprep.subr.mxu0 0.0
    %1542 = vmatpush1.msra.mxu0 0.0
    %1543 = vmatprep.subr.mxu0 0.0
    %1544 = vmatpush1.msra.mxu0 0.0
    %1545 = vmatprep.subr.mxu0 0.0
    %1546 = vmatpush1.msra.mxu0 0.0
    %1547 = vmatprep.subr.mxu0 0.0
    %1548 = vmatpush1.msra.mxu0 0.0
    %1549 = vmatprep.subr.mxu0 0.0
    %1550 = vmatpush1.msra.mxu0 0.0
    %1551 = vmatprep.subr.mxu0 0.0
    %1552 = vmatpush1.msra.mxu0 0.0
    %1553 = vmatprep.subr.mxu0 0.0
    %1554 = vmatpush1.msra.mxu0 0.0
    %1555 = vmatprep.subr.mxu0 0.0
    %1556 = vmatpush1.msra.mxu0 0.0
    %1557 = vmatprep.subr.mxu0 0.0
    %1558 = vmatpush1.msra.mxu0 0.0
    %1559 = vmatprep.subr.mxu0 0.0
    %1560 = vmatpush1.msra.mxu0 0.0
    %1561 = vmatprep.subr.mxu0 0.0
    %1562 = vmatpush1.msra.mxu0 0.0
    %1563 = vmatprep.subr.mxu0 0.0
    %1564 = vmatpush1.msra.mxu0 0.0
    %1565 = vmatprep.mubr.f32.mxu0 0.0
    %1566 = vmatmul.mubr.f32.gmra.mrb[0].mxu0 %v1499
    %v1567 = vpop.f32.mrb[0].mxu0
    %v1568 = vadd.f32 0.0, %v1567
    %v1569 = vpop.f32.mrb[0].mxu0
    %1570 = vdwg.mxu0
    %v1572 = vsel %vm1497, %v1392, 0
    %1574 = vmatprep.subr.mxu0 0.0
    %1575 = vmatpush1.msra.mxu0 %v1393
    %1576 = vmatprep.subr.mxu0 0.0
    %1577 = vmatpush1.msra.mxu0 %v1394
    %1578 = vmatprep.subr.mxu0 0.0
    %1579 = vmatpush1.msra.mxu0 %v1395
    %1580 = vmatprep.subr.mxu0 0.0
    %1581 = vmatpush1.msra.mxu0 %v1396
    %1582 = vmatprep.subr.mxu0 0.0
    %1583 = vmatpush1.msra.mxu0 %v1397
    %1584 = vmatprep.subr.mxu0 0.0
    %1585 = vmatpush1.msra.mxu0 %v1398
    %1586 = vmatprep.subr.mxu0 0.0
    %1587 = vmatpush1.msra.mxu0 %v1399
    %1588 = vmatprep.subr.mxu0 0.0
    %1589 = vmatpush1.msra.mxu0 %v1400
    %1590 = vmatprep.subr.mxu0 0.0
    %1591 = vmatpush1.msra.mxu0 0.0
    %1592 = vmatprep.subr.mxu0 0.0
    %1593 = vmatpush1.msra.mxu0 0.0
    %1594 = vmatprep.subr.mxu0 0.0
    %1595 = vmatpush1.msra.mxu0 0.0
    %1596 = vmatprep.subr.mxu0 0.0
    %1597 = vmatpush1.msra.mxu0 0.0
    %1598 = vmatprep.subr.mxu0 0.0
    %1599 = vmatpush1.msra.mxu0 0.0
    %1600 = vmatprep.subr.mxu0 0.0
    %1601 = vmatpush1.msra.mxu0 0.0
    %1602 = vmatprep.subr.mxu0 0.0
    %1603 = vmatpush1.msra.mxu0 0.0
    %1604 = vmatprep.subr.mxu0 0.0
    %1605 = vmatpush1.msra.mxu0 0.0
    %1606 = vmatprep.subr.mxu0 0.0
    %1607 = vmatpush1.msra.mxu0 0.0
    %1608 = vmatprep.subr.mxu0 0.0
    %1609 = vmatpush1.msra.mxu0 0.0
    %1610 = vmatprep.subr.mxu0 0.0
    %1611 = vmatpush1.msra.mxu0 0.0
    %1612 = vmatprep.subr.mxu0 0.0
    %1613 = vmatpush1.msra.mxu0 0.0
    %1614 = vmatprep.subr.mxu0 0.0
    %1615 = vmatpush1.msra.mxu0 0.0
    %1616 = vmatprep.subr.mxu0 0.0
    %1617 = vmatpush1.msra.mxu0 0.0
    %1618 = vmatprep.subr.mxu0 0.0
    %1619 = vmatpush1.msra.mxu0 0.0
    %1620 = vmatprep.subr.mxu0 0.0
    %1621 = vmatpush1.msra.mxu0 0.0
    %1622 = vmatprep.subr.mxu0 0.0
    %1623 = vmatpush1.msra.mxu0 0.0
    %1624 = vmatprep.subr.mxu0 0.0
    %1625 = vmatpush1.msra.mxu0 0.0
    %1626 = vmatprep.subr.mxu0 0.0
    %1627 = vmatpush1.msra.mxu0 0.0
    %1628 = vmatprep.subr.mxu0 0.0
    %1629 = vmatpush1.msra.mxu0 0.0
    %1630 = vmatprep.subr.mxu0 0.0
    %1631 = vmatpush1.msra.mxu0 0.0
    %1632 = vmatprep.subr.mxu0 0.0
    %1633 = vmatpush1.msra.mxu0 0.0
    %1634 = vmatprep.subr.mxu0 0.0
    %1635 = vmatpush1.msra.mxu0 0.0
    %1636 = vmatprep.subr.mxu0 0.0
    %1637 = vmatpush1.msra.mxu0 0.0
    %1638 = vmatprep.mubr.f32.mxu0 0.0
    %1639 = vmatmul.mubr.f32.gmra.mrb[0].mxu0 %v1572
    %v1640 = vpop.f32.mrb[0].mxu0
    %v1641 = vadd.f32 %v1568, %v1640
    %v1642 = vpop.f32.mrb[0].mxu0
    %1643 = vdwg.mxu0
    %v1644 = vld [vmem:[#allocation10] sm:$0xff]
    %v1645 = vld [vmem:[#allocation10 + $0x8] sm:$0xff]
    %v1646 = vld [vmem:[#allocation10 + $0x10] sm:$0xff]
    %v1647 = vld [vmem:[#allocation10 + $0x18] sm:$0xff]
    %v1648 = vld [vmem:[#allocation11] sm:$0xff]
    %v1649 = vld [vmem:[#allocation11 + $0x8] sm:$0xff]
    %v1650 = vld [vmem:[#allocation11 + $0x10] sm:$0xff]
    %v1651 = vld [vmem:[#allocation11 + $0x18] sm:$0xff]
    %v1660 = vrot.slane %v1265, 7
    %v1661 = vsel %vm1300, %v1660, %v1264
    %v1662 = vrot.slane %v1266, 6
    %v1663 = vsel %vm1303, %v1662, %v1661
    %v1664 = vrot.slane %v1267, 5
    %v1665 = vsel %vm1306, %v1664, %v1663
    %v1666 = vrot.slane %v1268, 4
    %v1667 = vsel %vm1309, %v1666, %v1665
    %v1668 = vrot.slane %v1269, 3
    %v1669 = vsel %vm1312, %v1668, %v1667
    %v1670 = vrot.slane %v1270, 2
    %v1671 = vsel %vm1315, %v1670, %v1669
    %v1672 = vrot.slane %v1271, 1
    %v1673 = vsel %vm1318, %v1672, %v1671
    %v1674 = vsel %vm159, %v1673, 0
    %1676 = vmatprep.subr.mxu0 0.0
    %1677 = vmatpush1.msra.mxu0 %v1648
    %1678 = vmatprep.subr.mxu0 0.0
    %1679 = vmatpush1.msra.mxu0 %v1649
    %1680 = vmatprep.subr.mxu0 0.0
    %1681 = vmatpush1.msra.mxu0 %v1650
    %1682 = vmatprep.subr.mxu0 0.0
    %1683 = vmatpush1.msra.mxu0 %v1651
    %1684 = vmatprep.subr.mxu0 0.0
    %1685 = vmatpush1.msra.mxu0 0.0
    %1686 = vmatprep.subr.mxu0 0.0
    %1687 = vmatpush1.msra.mxu0 0.0
    %1688 = vmatprep.subr.mxu0 0.0
    %1689 = vmatpush1.msra.mxu0 0.0
    %1690 = vmatprep.subr.mxu0 0.0
    %1691 = vmatpush1.msra.mxu0 0.0
    %1692 = vmatprep.subr.mxu0 0.0
    %1693 = vmatpush1.msra.mxu0 0.0
    %1694 = vmatprep.subr.mxu0 0.0
    %1695 = vmatpush1.msra.mxu0 0.0
    %1696 = vmatprep.subr.mxu0 0.0
    %1697 = vmatpush1.msra.mxu0 0.0
    %1698 = vmatprep.subr.mxu0 0.0
    %1699 = vmatpush1.msra.mxu0 0.0
    %1700 = vmatprep.subr.mxu0 0.0
    %1701 = vmatpush1.msra.mxu0 0.0
    %1702 = vmatprep.subr.mxu0 0.0
    %1703 = vmatpush1.msra.mxu0 0.0
    %1704 = vmatprep.subr.mxu0 0.0
    %1705 = vmatpush1.msra.mxu0 0.0
    %1706 = vmatprep.subr.mxu0 0.0
    %1707 = vmatpush1.msra.mxu0 0.0
    %1708 = vmatprep.subr.mxu0 0.0
    %1709 = vmatpush1.msra.mxu0 0.0
    %1710 = vmatprep.subr.mxu0 0.0
    %1711 = vmatpush1.msra.mxu0 0.0
    %1712 = vmatprep.subr.mxu0 0.0
    %1713 = vmatpush1.msra.mxu0 0.0
    %1714 = vmatprep.subr.mxu0 0.0
    %1715 = vmatpush1.msra.mxu0 0.0
    %1716 = vmatprep.subr.mxu0 0.0
    %1717 = vmatpush1.msra.mxu0 0.0
    %1718 = vmatprep.subr.mxu0 0.0
    %1719 = vmatpush1.msra.mxu0 0.0
    %1720 = vmatprep.subr.mxu0 0.0
    %1721 = vmatpush1.msra.mxu0 0.0
    %1722 = vmatprep.subr.mxu0 0.0
    %1723 = vmatpush1.msra.mxu0 0.0
    %1724 = vmatprep.subr.mxu0 0.0
    %1725 = vmatpush1.msra.mxu0 0.0
    %1726 = vmatprep.subr.mxu0 0.0
    %1727 = vmatpush1.msra.mxu0 0.0
    %1728 = vmatprep.subr.mxu0 0.0
    %1729 = vmatpush1.msra.mxu0 0.0
    %1730 = vmatprep.subr.mxu0 0.0
    %1731 = vmatpush1.msra.mxu0 0.0
    %1732 = vmatprep.subr.mxu0 0.0
    %1733 = vmatpush1.msra.mxu0 0.0
    %1734 = vmatprep.subr.mxu0 0.0
    %1735 = vmatpush1.msra.mxu0 0.0
    %1736 = vmatprep.subr.mxu0 0.0
    %1737 = vmatpush1.msra.mxu0 0.0
    %1738 = vmatprep.subr.mxu0 0.0
    %1739 = vmatpush1.msra.mxu0 0.0
    %1740 = vmatprep.mubr.f32.mxu0 0.0
    %1741 = vmatmul.mubr.f32.gmra.mrb[0].mxu0 %v1674
    %v1742 = vpop.f32.mrb[0].mxu0
    %v1743 = vadd.f32 0.0, %v1742
    %v1744 = vpop.f32.mrb[0].mxu0
    %1745 = vdwg.mxu0
    %1746 = vmatprep.subr.mxu0 0.0
    %1747 = vmatpush1.msra.mxu0 %v1644
    %1748 = vmatprep.subr.mxu0 0.0
    %1749 = vmatpush1.msra.mxu0 %v1645
    %1750 = vmatprep.subr.mxu0 0.0
    %1751 = vmatpush1.msra.mxu0 %v1646
    %1752 = vmatprep.subr.mxu0 0.0
    %1753 = vmatpush1.msra.mxu0 %v1647
    %1754 = vmatprep.subr.mxu0 0.0
    %1755 = vmatpush1.msra.mxu0 0.0
    %1756 = vmatprep.subr.mxu0 0.0
    %1757 = vmatpush1.msra.mxu0 0.0
    %1758 = vmatprep.subr.mxu0 0.0
    %1759 = vmatpush1.msra.mxu0 0.0
    %1760 = vmatprep.subr.mxu0 0.0
    %1761 = vmatpush1.msra.mxu0 0.0
    %1762 = vmatprep.subr.mxu0 0.0
    %1763 = vmatpush1.msra.mxu0 0.0
    %1764 = vmatprep.subr.mxu0 0.0
    %1765 = vmatpush1.msra.mxu0 0.0
    %1766 = vmatprep.subr.mxu0 0.0
    %1767 = vmatpush1.msra.mxu0 0.0
    %1768 = vmatprep.subr.mxu0 0.0
    %1769 = vmatpush1.msra.mxu0 0.0
    %1770 = vmatprep.subr.mxu0 0.0
    %1771 = vmatpush1.msra.mxu0 0.0
    %1772 = vmatprep.subr.mxu0 0.0
    %1773 = vmatpush1.msra.mxu0 0.0
    %1774 = vmatprep.subr.mxu0 0.0
    %1775 = vmatpush1.msra.mxu0 0.0
    %1776 = vmatprep.subr.mxu0 0.0
    %1777 = vmatpush1.msra.mxu0 0.0
    %1778 = vmatprep.subr.mxu0 0.0
    %1779 = vmatpush1.msra.mxu0 0.0
    %1780 = vmatprep.subr.mxu0 0.0
    %1781 = vmatpush1.msra.mxu0 0.0
    %1782 = vmatprep.subr.mxu0 0.0
    %1783 = vmatpush1.msra.mxu0 0.0
    %1784 = vmatprep.subr.mxu0 0.0
    %1785 = vmatpush1.msra.mxu0 0.0
    %1786 = vmatprep.subr.mxu0 0.0
    %1787 = vmatpush1.msra.mxu0 0.0
    %1788 = vmatprep.subr.mxu0 0.0
    %1789 = vmatpush1.msra.mxu0 0.0
    %1790 = vmatprep.subr.mxu0 0.0
    %1791 = vmatpush1.msra.mxu0 0.0
    %1792 = vmatprep.subr.mxu0 0.0
    %1793 = vmatpush1.msra.mxu0 0.0
    %1794 = vmatprep.subr.mxu0 0.0
    %1795 = vmatpush1.msra.mxu0 0.0
    %1796 = vmatprep.subr.mxu0 0.0
    %1797 = vmatpush1.msra.mxu0 0.0
    %1798 = vmatprep.subr.mxu0 0.0
    %1799 = vmatpush1.msra.mxu0 0.0
    %1800 = vmatprep.subr.mxu0 0.0
    %1801 = vmatpush1.msra.mxu0 0.0
    %1802 = vmatprep.subr.mxu0 0.0
    %1803 = vmatpush1.msra.mxu0 0.0
    %1804 = vmatprep.subr.mxu0 0.0
    %1805 = vmatpush1.msra.mxu0 0.0
    %1806 = vmatprep.subr.mxu0 0.0
    %1807 = vmatpush1.msra.mxu0 0.0
    %1808 = vmatprep.subr.mxu0 0.0
    %1809 = vmatpush1.msra.mxu0 0.0
    %1810 = vmatprep.mubr.f32.mxu0 0.0
    %1811 = vmatmul.mubr.f32.gmra.mrb[0].mxu0 %v1320
    %v1812 = vpop.f32.mrb[0].mxu0
    %v1813 = vadd.f32 %v1743, %v1812
    %v1814 = vpop.f32.mrb[0].mxu0
    %1815 = vdwg.mxu0
    %v1816 = vld [vmem:[%s7] sm:$0x1]
    %v1818 = vlaneseq
    %v1819 = vshrl.u32 %v1818, 7
    %v1820 = vsub.s32 0, %v1819
    %v1821 = vrot.slane %v1816, %v1820
    %v1823 = vadd.f32 %v1813, %v1821
    %v1824 = vmax.f32 %v1823, 0.0
    %v1825 = vld [vmem:[#allocation13] sm:$0xff]
    %v1826 = vld [vmem:[#allocation13 + $0x8] sm:$0xff]
    %v1827 = vld [vmem:[#allocation13 + $0x10] sm:$0xff]
    %v1828 = vld [vmem:[#allocation13 + $0x18] sm:$0xff]
    %v1829 = vld [vmem:[#allocation13 + $0x20] sm:$0xff]
    %v1830 = vld [vmem:[#allocation13 + $0x28] sm:$0xff]
    %v1831 = vld [vmem:[#allocation13 + $0x30] sm:$0xff]
    %v1832 = vld [vmem:[#allocation13 + $0x38] sm:$0xff]
    %v1834 = vsel %vm1497, %v1824, 0
    %1836 = vmatprep.subr.mxu0 0.0
    %1837 = vmatpush1.msra.mxu0 %v1825
    %1838 = vmatprep.subr.mxu0 0.0
    %1839 = vmatpush1.msra.mxu0 %v1826
    %1840 = vmatprep.subr.mxu0 0.0
    %1841 = vmatpush1.msra.mxu0 %v1827
    %1842 = vmatprep.subr.mxu0 0.0
    %1843 = vmatpush1.msra.mxu0 %v1828
    %1844 = vmatprep.subr.mxu0 0.0
    %1845 = vmatpush1.msra.mxu0 %v1829
    %1846 = vmatprep.subr.mxu0 0.0
    %1847 = vmatpush1.msra.mxu0 %v1830
    %1848 = vmatprep.subr.mxu0 0.0
    %1849 = vmatpush1.msra.mxu0 %v1831
    %1850 = vmatprep.subr.mxu0 0.0
    %1851 = vmatpush1.msra.mxu0 %v1832
    %1852 = vmatprep.subr.mxu0 0.0
    %1853 = vmatpush1.msra.mxu0 0.0
    %1854 = vmatprep.subr.mxu0 0.0
    %1855 = vmatpush1.msra.mxu0 0.0
    %1856 = vmatprep.subr.mxu0 0.0
    %1857 = vmatpush1.msra.mxu0 0.0
    %1858 = vmatprep.subr.mxu0 0.0
    %1859 = vmatpush1.msra.mxu0 0.0
    %1860 = vmatprep.subr.mxu0 0.0
    %1861 = vmatpush1.msra.mxu0 0.0
    %1862 = vmatprep.subr.mxu0 0.0
    %1863 = vmatpush1.msra.mxu0 0.0
    %1864 = vmatprep.subr.mxu0 0.0
    %1865 = vmatpush1.msra.mxu0 0.0
    %1866 = vmatprep.subr.mxu0 0.0
    %1867 = vmatpush1.msra.mxu0 0.0
    %1868 = vmatprep.subr.mxu0 0.0
    %1869 = vmatpush1.msra.mxu0 0.0
    %1870 = vmatprep.subr.mxu0 0.0
    %1871 = vmatpush1.msra.mxu0 0.0
    %1872 = vmatprep.subr.mxu0 0.0
    %1873 = vmatpush1.msra.mxu0 0.0
    %1874 = vmatprep.subr.mxu0 0.0
    %1875 = vmatpush1.msra.mxu0 0.0
    %1876 = vmatprep.subr.mxu0 0.0
    %1877 = vmatpush1.msra.mxu0 0.0
    %1878 = vmatprep.subr.mxu0 0.0
    %1879 = vmatpush1.msra.mxu0 0.0
    %1880 = vmatprep.subr.mxu0 0.0
    %1881 = vmatpush1.msra.mxu0 0.0
    %1882 = vmatprep.subr.mxu0 0.0
    %1883 = vmatpush1.msra.mxu0 0.0
    %1884 = vmatprep.subr.mxu0 0.0
    %1885 = vmatpush1.msra.mxu0 0.0
    %1886 = vmatprep.subr.mxu0 0.0
    %1887 = vmatpush1.msra.mxu0 0.0
    %1888 = vmatprep.subr.mxu0 0.0
    %1889 = vmatpush1.msra.mxu0 0.0
    %1890 = vmatprep.subr.mxu0 0.0
    %1891 = vmatpush1.msra.mxu0 0.0
    %1892 = vmatprep.subr.mxu0 0.0
    %1893 = vmatpush1.msra.mxu0 0.0
    %1894 = vmatprep.subr.mxu0 0.0
    %1895 = vmatpush1.msra.mxu0 0.0
    %1896 = vmatprep.subr.mxu0 0.0
    %1897 = vmatpush1.msra.mxu0 0.0
    %1898 = vmatprep.subr.mxu0 0.0
    %1899 = vmatpush1.msra.mxu0 0.0
    %1900 = vmatprep.mubr.f32.mxu0 0.0
    %1901 = vmatmul.mubr.f32.gmra.mrb[0].mxu0 %v1834
    %v1902 = vpop.f32.mrb[0].mxu0
    %v1903 = vadd.f32 0.0, %v1902
    %v1904 = vpop.f32.mrb[0].mxu0
    %1905 = vdwg.mxu0
    %v1906 = vadd.f32 %v1641, %v1903
    %1907 = vmatprep.subr.mxu0 0.0
    %1908 = vmatpush1.msra.mxu0 %v1648
    %1909 = vmatprep.subr.mxu0 0.0
    %1910 = vmatpush1.msra.mxu0 %v1649
    %1911 = vmatprep.subr.mxu0 0.0
    %1912 = vmatpush1.msra.mxu0 %v1650
    %1913 = vmatprep.subr.mxu0 0.0
    %1914 = vmatpush1.msra.mxu0 %v1651
    %1915 = vmatprep.subr.mxu0 0.0
    %1916 = vmatpush1.msra.mxu0 0.0
    %1917 = vmatprep.subr.mxu0 0.0
    %1918 = vmatpush1.msra.mxu0 0.0
    %1919 = vmatprep.subr.mxu0 0.0
    %1920 = vmatpush1.msra.mxu0 0.0
    %1921 = vmatprep.subr.mxu0 0.0
    %1922 = vmatpush1.msra.mxu0 0.0
    %1923 = vmatprep.subr.mxu0 0.0
    %1924 = vmatpush1.msra.mxu0 0.0
    %1925 = vmatprep.subr.mxu0 0.0
    %1926 = vmatpush1.msra.mxu0 0.0
    %1927 = vmatprep.subr.mxu0 0.0
    %1928 = vmatpush1.msra.mxu0 0.0
    %1929 = vmatprep.subr.mxu0 0.0
    %1930 = vmatpush1.msra.mxu0 0.0
    %1931 = vmatprep.subr.mxu0 0.0
    %1932 = vmatpush1.msra.mxu0 0.0
    %1933 = vmatprep.subr.mxu0 0.0
    %1934 = vmatpush1.msra.mxu0 0.0
    %1935 = vmatprep.subr.mxu0 0.0
    %1936 = vmatpush1.msra.mxu0 0.0
    %1937 = vmatprep.subr.mxu0 0.0
    %1938 = vmatpush1.msra.mxu0 0.0
    %1939 = vmatprep.subr.mxu0 0.0
    %1940 = vmatpush1.msra.mxu0 0.0
    %1941 = vmatprep.subr.mxu0 0.0
    %1942 = vmatpush1.msra.mxu0 0.0
    %1943 = vmatprep.subr.mxu0 0.0
    %1944 = vmatpush1.msra.mxu0 0.0
    %1945 = vmatprep.subr.mxu0 0.0
    %1946 = vmatpush1.msra.mxu0 0.0
    %1947 = vmatprep.subr.mxu0 0.0
    %1948 = vmatpush1.msra.mxu0 0.0
    %1949 = vmatprep.subr.mxu0 0.0
    %1950 = vmatpush1.msra.mxu0 0.0
    %1951 = vmatprep.subr.mxu0 0.0
    %1952 = vmatpush1.msra.mxu0 0.0
    %1953 = vmatprep.subr.mxu0 0.0
    %1954 = vmatpush1.msra.mxu0 0.0
    %1955 = vmatprep.subr.mxu0 0.0
    %1956 = vmatpush1.msra.mxu0 0.0
    %1957 = vmatprep.subr.mxu0 0.0
    %1958 = vmatpush1.msra.mxu0 0.0
    %1959 = vmatprep.subr.mxu0 0.0
    %1960 = vmatpush1.msra.mxu0 0.0
    %1961 = vmatprep.subr.mxu0 0.0
    %1962 = vmatpush1.msra.mxu0 0.0
    %1963 = vmatprep.subr.mxu0 0.0
    %1964 = vmatpush1.msra.mxu0 0.0
    %1965 = vmatprep.subr.mxu0 0.0
    %1966 = vmatpush1.msra.mxu0 0.0
    %1967 = vmatprep.subr.mxu0 0.0
    %1968 = vmatpush1.msra.mxu0 0.0
    %1969 = vmatprep.subr.mxu0 0.0
    %1970 = vmatpush1.msra.mxu0 0.0
    %1971 = vmatprep.mubr.f32.mxu0 0.0
    %1972 = vmatmul.mubr.f32.gmra.mrb[0].mxu0 %v1416
    %v1973 = vpop.f32.mrb[0].mxu0
    %v1974 = vadd.f32 0.0, %v1973
    %v1975 = vpop.f32.mrb[0].mxu0
    %1976 = vdwg.mxu0
    %v1985 = vrot.slane %v1273, 7
    %v1986 = vsel %vm1300, %v1985, %v1272
    %v1987 = vrot.slane %v1274, 6
    %v1988 = vsel %vm1303, %v1987, %v1986
    %v1989 = vrot.slane %v1275, 5
    %v1990 = vsel %vm1306, %v1989, %v1988
    %v1991 = vrot.slane %v1276, 4
    %v1992 = vsel %vm1309, %v1991, %v1990
    %v1993 = vrot.slane %v1277, 3
    %v1994 = vsel %vm1312, %v1993, %v1992
    %v1995 = vrot.slane %v1278, 2
    %v1996 = vsel %vm1315, %v1995, %v1994
    %v1997 = vrot.slane %v1279, 1
    %v1998 = vsel %vm1318, %v1997, %v1996
    %v1999 = vsel %vm159, %v1998, 0
    %2001 = vmatprep.subr.mxu0 0.0
    %2002 = vmatpush1.msra.mxu0 %v1644
    %2003 = vmatprep.subr.mxu0 0.0
    %2004 = vmatpush1.msra.mxu0 %v1645
    %2005 = vmatprep.subr.mxu0 0.0
    %2006 = vmatpush1.msra.mxu0 %v1646
    %2007 = vmatprep.subr.mxu0 0.0
    %2008 = vmatpush1.msra.mxu0 %v1647
    %2009 = vmatprep.subr.mxu0 0.0
    %2010 = vmatpush1.msra.mxu0 0.0
    %2011 = vmatprep.subr.mxu0 0.0
    %2012 = vmatpush1.msra.mxu0 0.0
    %2013 = vmatprep.subr.mxu0 0.0
    %2014 = vmatpush1.msra.mxu0 0.0
    %2015 = vmatprep.subr.mxu0 0.0
    %2016 = vmatpush1.msra.mxu0 0.0
    %2017 = vmatprep.subr.mxu0 0.0
    %2018 = vmatpush1.msra.mxu0 0.0
    %2019 = vmatprep.subr.mxu0 0.0
    %2020 = vmatpush1.msra.mxu0 0.0
    %2021 = vmatprep.subr.mxu0 0.0
    %2022 = vmatpush1.msra.mxu0 0.0
    %2023 = vmatprep.subr.mxu0 0.0
    %2024 = vmatpush1.msra.mxu0 0.0
    %2025 = vmatprep.subr.mxu0 0.0
    %2026 = vmatpush1.msra.mxu0 0.0
    %2027 = vmatprep.subr.mxu0 0.0
    %2028 = vmatpush1.msra.mxu0 0.0
    %2029 = vmatprep.subr.mxu0 0.0
    %2030 = vmatpush1.msra.mxu0 0.0
    %2031 = vmatprep.subr.mxu0 0.0
    %2032 = vmatpush1.msra.mxu0 0.0
    %2033 = vmatprep.subr.mxu0 0.0
    %2034 = vmatpush1.msra.mxu0 0.0
    %2035 = vmatprep.subr.mxu0 0.0
    %2036 = vmatpush1.msra.mxu0 0.0
    %2037 = vmatprep.subr.mxu0 0.0
    %2038 = vmatpush1.msra.mxu0 0.0
    %2039 = vmatprep.subr.mxu0 0.0
    %2040 = vmatpush1.msra.mxu0 0.0
    %2041 = vmatprep.subr.mxu0 0.0
    %2042 = vmatpush1.msra.mxu0 0.0
    %2043 = vmatprep.subr.mxu0 0.0
    %2044 = vmatpush1.msra.mxu0 0.0
    %2045 = vmatprep.subr.mxu0 0.0
    %2046 = vmatpush1.msra.mxu0 0.0
    %2047 = vmatprep.subr.mxu0 0.0
    %2048 = vmatpush1.msra.mxu0 0.0
    %2049 = vmatprep.subr.mxu0 0.0
    %2050 = vmatpush1.msra.mxu0 0.0
    %2051 = vmatprep.subr.mxu0 0.0
    %2052 = vmatpush1.msra.mxu0 0.0
    %2053 = vmatprep.subr.mxu0 0.0
    %2054 = vmatpush1.msra.mxu0 0.0
    %2055 = vmatprep.subr.mxu0 0.0
    %2056 = vmatpush1.msra.mxu0 0.0
    %2057 = vmatprep.subr.mxu0 0.0
    %2058 = vmatpush1.msra.mxu0 0.0
    %2059 = vmatprep.subr.mxu0 0.0
    %2060 = vmatpush1.msra.mxu0 0.0
    %2061 = vmatprep.subr.mxu0 0.0
    %2062 = vmatpush1.msra.mxu0 0.0
    %2063 = vmatprep.subr.mxu0 0.0
    %2064 = vmatpush1.msra.mxu0 0.0
    %2065 = vmatprep.mubr.f32.mxu0 0.0
    %2066 = vmatmul.mubr.f32.gmra.mrb[0].mxu0 %v1999
    %v2067 = vpop.f32.mrb[0].mxu0
    %v2068 = vadd.f32 %v1974, %v2067
    %v2069 = vpop.f32.mrb[0].mxu0
    %2070 = vdwg.mxu0
    %v2071 = vadd.f32 %v2068, %v1821
    %v2072 = vmax.f32 %v2071, 0.0
    %v2073 = vld [vmem:[#allocation14] sm:$0xff]
    %v2074 = vld [vmem:[#allocation14 + $0x8] sm:$0xff]
    %v2075 = vld [vmem:[#allocation14 + $0x10] sm:$0xff]
    %v2076 = vld [vmem:[#allocation14 + $0x18] sm:$0xff]
    %v2077 = vld [vmem:[#allocation14 + $0x20] sm:$0xff]
    %v2078 = vld [vmem:[#allocation14 + $0x28] sm:$0xff]
    %v2079 = vld [vmem:[#allocation14 + $0x30] sm:$0xff]
    %v2080 = vld [vmem:[#allocation14 + $0x38] sm:$0xff]
    %v2082 = vsel %vm1497, %v2072, 0
    %2084 = vmatprep.subr.mxu0 0.0
    %2085 = vmatpush1.msra.mxu0 %v2073
    %2086 = vmatprep.subr.mxu0 0.0
    %2087 = vmatpush1.msra.mxu0 %v2074
    %2088 = vmatprep.subr.mxu0 0.0
    %2089 = vmatpush1.msra.mxu0 %v2075
    %2090 = vmatprep.subr.mxu0 0.0
    %2091 = vmatpush1.msra.mxu0 %v2076
    %2092 = vmatprep.subr.mxu0 0.0
    %2093 = vmatpush1.msra.mxu0 %v2077
    %2094 = vmatprep.subr.mxu0 0.0
    %2095 = vmatpush1.msra.mxu0 %v2078
    %2096 = vmatprep.subr.mxu0 0.0
    %2097 = vmatpush1.msra.mxu0 %v2079
    %2098 = vmatprep.subr.mxu0 0.0
    %2099 = vmatpush1.msra.mxu0 %v2080
    %2100 = vmatprep.subr.mxu0 0.0
    %2101 = vmatpush1.msra.mxu0 0.0
    %2102 = vmatprep.subr.mxu0 0.0
    %2103 = vmatpush1.msra.mxu0 0.0
    %2104 = vmatprep.subr.mxu0 0.0
    %2105 = vmatpush1.msra.mxu0 0.0
    %2106 = vmatprep.subr.mxu0 0.0
    %2107 = vmatpush1.msra.mxu0 0.0
    %2108 = vmatprep.subr.mxu0 0.0
    %2109 = vmatpush1.msra.mxu0 0.0
    %2110 = vmatprep.subr.mxu0 0.0
    %2111 = vmatpush1.msra.mxu0 0.0
    %2112 = vmatprep.subr.mxu0 0.0
    %2113 = vmatpush1.msra.mxu0 0.0
    %2114 = vmatprep.subr.mxu0 0.0
    %2115 = vmatpush1.msra.mxu0 0.0
    %2116 = vmatprep.subr.mxu0 0.0
    %2117 = vmatpush1.msra.mxu0 0.0
    %2118 = vmatprep.subr.mxu0 0.0
    %2119 = vmatpush1.msra.mxu0 0.0
    %2120 = vmatprep.subr.mxu0 0.0
    %2121 = vmatpush1.msra.mxu0 0.0
    %2122 = vmatprep.subr.mxu0 0.0
    %2123 = vmatpush1.msra.mxu0 0.0
    %2124 = vmatprep.subr.mxu0 0.0
    %2125 = vmatpush1.msra.mxu0 0.0
    %2126 = vmatprep.subr.mxu0 0.0
    %2127 = vmatpush1.msra.mxu0 0.0
    %2128 = vmatprep.subr.mxu0 0.0
    %2129 = vmatpush1.msra.mxu0 0.0
    %2130 = vmatprep.subr.mxu0 0.0
    %2131 = vmatpush1.msra.mxu0 0.0
    %2132 = vmatprep.subr.mxu0 0.0
    %2133 = vmatpush1.msra.mxu0 0.0
    %2134 = vmatprep.subr.mxu0 0.0
    %2135 = vmatpush1.msra.mxu0 0.0
    %2136 = vmatprep.subr.mxu0 0.0
    %2137 = vmatpush1.msra.mxu0 0.0
    %2138 = vmatprep.subr.mxu0 0.0
    %2139 = vmatpush1.msra.mxu0 0.0
    %2140 = vmatprep.subr.mxu0 0.0
    %2141 = vmatpush1.msra.mxu0 0.0
    %2142 = vmatprep.subr.mxu0 0.0
    %2143 = vmatpush1.msra.mxu0 0.0
    %2144 = vmatprep.subr.mxu0 0.0
    %2145 = vmatpush1.msra.mxu0 0.0
    %2146 = vmatprep.subr.mxu0 0.0
    %2147 = vmatpush1.msra.mxu0 0.0
    %2148 = vmatprep.mubr.f32.mxu0 0.0
    %2149 = vmatmul.mubr.f32.gmra.mrb[0].mxu0 %v2082
    %v2150 = vpop.f32.mrb[0].mxu0
    %v2151 = vadd.f32 0.0, %v2150
    %v2152 = vpop.f32.mrb[0].mxu0
    %2153 = vdwg.mxu0
    %v2154 = vadd.f32 %v1906, %v2151
    %v2155 = vld [vmem:[%s10] sm:$0xff]
    %v2156 = vld [vmem:[%s10 + $0x8] sm:$0xff]
    %v2157 = vld [vmem:[%s10 + $0x10] sm:$0xff]
    %v2158 = vld [vmem:[%s10 + $0x18] sm:$0xff]
    %2159 = vmatprep.subr.mxu0 0.0
    %2160 = vmatpush1.msra.mxu0 %v2155
    %2161 = vmatprep.subr.mxu0 0.0
    %2162 = vmatpush1.msra.mxu0 %v2156
    %2163 = vmatprep.subr.mxu0 0.0
    %2164 = vmatpush1.msra.mxu0 %v2157
    %2165 = vmatprep.subr.mxu0 0.0
    %2166 = vmatpush1.msra.mxu0 %v2158
    %2167 = vmatprep.subr.mxu0 0.0
    %2168 = vmatpush1.msra.mxu0 0.0
    %2169 = vmatprep.subr.mxu0 0.0
    %2170 = vmatpush1.msra.mxu0 0.0
    %2171 = vmatprep.subr.mxu0 0.0
    %2172 = vmatpush1.msra.mxu0 0.0
    %2173 = vmatprep.subr.mxu0 0.0
    %2174 = vmatpush1.msra.mxu0 0.0
    %2175 = vmatprep.subr.mxu0 0.0
    %2176 = vmatpush1.msra.mxu0 0.0
    %2177 = vmatprep.subr.mxu0 0.0
    %2178 = vmatpush1.msra.mxu0 0.0
    %2179 = vmatprep.subr.mxu0 0.0
    %2180 = vmatpush1.msra.mxu0 0.0
    %2181 = vmatprep.subr.mxu0 0.0
    %2182 = vmatpush1.msra.mxu0 0.0
    %2183 = vmatprep.subr.mxu0 0.0
    %2184 = vmatpush1.msra.mxu0 0.0
    %2185 = vmatprep.subr.mxu0 0.0
    %2186 = vmatpush1.msra.mxu0 0.0
    %2187 = vmatprep.subr.mxu0 0.0
    %2188 = vmatpush1.msra.mxu0 0.0
    %2189 = vmatprep.subr.mxu0 0.0
    %2190 = vmatpush1.msra.mxu0 0.0
    %2191 = vmatprep.subr.mxu0 0.0
    %2192 = vmatpush1.msra.mxu0 0.0
    %2193 = vmatprep.subr.mxu0 0.0
    %2194 = vmatpush1.msra.mxu0 0.0
    %2195 = vmatprep.subr.mxu0 0.0
    %2196 = vmatpush1.msra.mxu0 0.0
    %2197 = vmatprep.subr.mxu0 0.0
    %2198 = vmatpush1.msra.mxu0 0.0
    %2199 = vmatprep.subr.mxu0 0.0
    %2200 = vmatpush1.msra.mxu0 0.0
    %2201 = vmatprep.subr.mxu0 0.0
    %2202 = vmatpush1.msra.mxu0 0.0
    %2203 = vmatprep.subr.mxu0 0.0
    %2204 = vmatpush1.msra.mxu0 0.0
    %2205 = vmatprep.subr.mxu0 0.0
    %2206 = vmatpush1.msra.mxu0 0.0
    %2207 = vmatprep.subr.mxu0 0.0
    %2208 = vmatpush1.msra.mxu0 0.0
    %2209 = vmatprep.subr.mxu0 0.0
    %2210 = vmatpush1.msra.mxu0 0.0
    %2211 = vmatprep.subr.mxu0 0.0
    %2212 = vmatpush1.msra.mxu0 0.0
    %2213 = vmatprep.subr.mxu0 0.0
    %2214 = vmatpush1.msra.mxu0 0.0
    %2215 = vmatprep.subr.mxu0 0.0
    %2216 = vmatpush1.msra.mxu0 0.0
    %2217 = vmatprep.subr.mxu0 0.0
    %2218 = vmatpush1.msra.mxu0 0.0
    %2219 = vmatprep.subr.mxu0 0.0
    %2220 = vmatpush1.msra.mxu0 0.0
    %2221 = vmatprep.subr.mxu0 0.0
    %2222 = vmatpush1.msra.mxu0 0.0
    %2223 = vmatprep.mubr.f32.mxu0 0.0
    %2224 = vmatmul.mubr.f32.gmra.mrb[0].mxu0 %v1674
    %v2225 = vpop.f32.mrb[0].mxu0
    %v2226 = vadd.f32 0.0, %v2225
    %v2227 = vpop.f32.mrb[0].mxu0
    %2228 = vdwg.mxu0
    %v2229 = vadd.f32 %v2154, %v2226
    %v2230 = vld [vmem:[%s11] sm:$0x1]
    %v2232 = vlaneseq
    %v2233 = vshrl.u32 %v2232, 7
    %v2234 = vsub.s32 0, %v2233
    %v2235 = vrot.slane %v2230, %v2234
    %v2237 = vadd.f32 %v2229, %v2235
    %2238 = vst [vmem:[#allocation16] sm:$0xff] %v2237
    // Predicated region
    $region82: #{tpu_custom_call.1} parent=1 // pred_check
      _
    $region83: #{tpu_custom_call.1} parent=1 // pred_check_branch
      %2240 = sbr.rel (0) target = $region85
    $region84: #{tpu_custom_call.1} parent=1 // pred_region
      %s2242 = ssub.s32 128, 128
      %2243 = vsyncadd [#allocation4], %s2242
      %s2245 = sshll.u32 [#allocation16], 4
      %s2246 = int_to_ptr.vmem [resolvable:$true] %s2245
      %2248 = dma.vmem_to_hbm [thread:$0]  %s2246, 128, %s12, [#allocation4]
    $region85: #{tpu_custom_call.1} parent=1 // pred_fallthru
      _
    // Predicated region
    $region86: #{tpu_custom_call.1} parent=1 // pred_check
      _
    $region87: #{tpu_custom_call.1} parent=1 // pred_check_branch
      %2250 = sbr.rel (0) target = $region89
    $region88: #{tpu_custom_call.1} parent=1 // pred_region
      %2251 = dma.done [#allocation4], 128
    $region89: #{tpu_custom_call.1} parent=1 // pred_fallthru
      _
    %2252 = vsyncpa [#allocation3], 1
    %2253 = vsyncpa [#allocation6], 1
    %2254 = vsyncpa [#allocation9], 1
    %2255 = vsyncpa [#allocation12], 1
    %2256 = vsyncpa [#allocation15], 1
    %2257 = vsyncpa [#allocation4], 1

</llo_original>
